<compile_context>
chip_gen: v6e
topology: v6e:2x2x1
jax: 0.10.0
libtpu: 0.0.40
codegen_flags: <defaults>
</compile_context>

<pallas_src>
import jax
import jax.numpy as jnp
import numpy as np
from jax import lax
from jax.experimental import pallas as pl
from jax.experimental.pallas import tpu as pltpu  # noqa: F401  (TPU backend)

PAD_ID = 1                     # RoBERTa-style pad token id
B, S, H, F, V, NUM_LABELS = 2, 8, 32, 64, 50, 2
VP = 64                        # padded vocab rows (== F, so emb & w2 share one 64-row slab)
LANES = 128                    # lane-panel width of the packed weight slabs
VEC_ROWS = 32

# lane offsets of the six 128-lane panels inside w_h: [wq|wk|wv|wo|w1|wc]
_Q, _K, _V, _O, _F1, _C = (i * LANES for i in range(6))
# sublane rows inside the vec slab (rows 0..B*S-1 hold pos_emb tiled to (B*S,H))
(_BQ, _BK, _BV, _BO, _B1, _B2,
 _LN1G, _LN1B, _LN2G, _LN2B, _BC) = range(B * S, B * S + 11)


# ----------------------------------------------------------------------------
# Single fused kernel: embedding + encoder block + last-token select +
#                      classifier + sigmoid + loss
# ----------------------------------------------------------------------------
def fused_model_kernel(ids_ref, idsc_ref, lab_ref, wh_ref, wv_ref, vec_ref, out_ref):
    ids = ids_ref[...]                                    # (B, S)    int32
    ids_col = idsc_ref[...]                               # (B*S, 1)  int32
    lab = lab_ref[...].astype(jnp.float32)                # (B, 1)

    wh = wh_ref[...]                                      # (H, 6*128)  H-row weights
    wv = wv_ref[...]                                      # (VP, 2*128) [emb | w2]
    vec = vec_ref[...]                                    # (32, 128)   pos_emb + biases + LN

    # ---- input_ids-derived glue, fully in-kernel (VPU) ----------------------
    maskf = (ids != PAD_ID).astype(jnp.float32)           # (B, S)
    bias = (maskf - 1.0) * 1e9                            # 0 valid / -1e9 pad
    lengths = jnp.sum(maskf, axis=-1, keepdims=True) - 1.0            # (B, 1)
    lengths = jnp.where(lengths < 0, jnp.float32(S - 1), lengths)     # all-pad -> wrap like [-1]

    # ---- embedding lookup as a one-hot MXU matmul ---------------------------
    vocab_iota = lax.broadcasted_iota(jnp.int32, (B * S, VP), 1)
    onehot = (vocab_iota == ids_col).astype(jnp.float32)               # (B*S, VP)
    x = (jnp.dot(onehot, wv[:, 0:H], preferred_element_type=jnp.float32)
         + vec[0:B * S, 0:H])                                          # + tiled pos_emb

    # ---- fused QKV projection: one MXU push over three 128-lane panels ------
    qkv = jnp.dot(x, wh[:, 0:3 * LANES], preferred_element_type=jnp.float32)   # (B*S, 384)
    bq = vec[_BQ:_BQ + 1, 0:H]
    bk = vec[_BK:_BK + 1, 0:H]
    bv = vec[_BV:_BV + 1, 0:H]

    # ---- per-sequence single-head attention (B statically unrolled) ---------
    scale = 1.0 / (H ** 0.5)
    ctx_rows = []
    for b in range(B):
        lo = b * S
        qb = qkv[lo:lo + S, _Q:_Q + H] + bq                           # (S, H)
        kb = qkv[lo:lo + S, _K:_K + H] + bk
        vb = qkv[lo:lo + S, _V:_V + H] + bv
        s = lax.dot_general(qb, kb, (((1,), (1,)), ((), ())),         # q @ k^T, no vxpose
                            preferred_element_type=jnp.float32) * scale
        s = s + bias[b:b + 1, :]                                      # key mask
        m = jnp.max(s, axis=-1, keepdims=True)
        e = jnp.exp(s - m)
        inv = pl.reciprocal(jnp.sum(e, axis=-1, keepdims=True), approx=True)
        ctx_rows.append(jnp.dot(e * inv, vb, preferred_element_type=jnp.float32))
    ctx = jnp.concatenate(ctx_rows, axis=0)                           # (B*S, H)

    attn_out = (jnp.dot(ctx, wh[:, _O:_O + H], preferred_element_type=jnp.float32)
                + vec[_BO:_BO + 1, 0:H])

    def layer_norm(y, g, b_):
        mu = jnp.mean(y, axis=-1, keepdims=True)
        var = jnp.mean((y - mu) ** 2, axis=-1, keepdims=True)
        return (y - mu) * lax.rsqrt(var + 1e-5) * g + b_

    x1 = layer_norm(x + attn_out, vec[_LN1G:_LN1G + 1, 0:H], vec[_LN1B:_LN1B + 1, 0:H])
    h = (jnp.dot(x1, wh[:, _F1:_F1 + F], preferred_element_type=jnp.float32)
         + vec[_B1:_B1 + 1, 0:F])
    h = jax.nn.gelu(h, approximate=True)
    ffn = (jnp.dot(h, wv[:, LANES:LANES + H], preferred_element_type=jnp.float32)
           + vec[_B2:_B2 + 1, 0:H])
    x2 = layer_norm(x1 + ffn, vec[_LN2G:_LN2G + 1, 0:H], vec[_LN2B:_LN2B + 1, 0:H])  # (B*S, H)

    # ---- outputs[range(bs), lengths, :] via block-diagonal one-hot matmul ----
    colf = lax.broadcasted_iota(jnp.int32, (B, B * S), 1).astype(jnp.float32)
    rowf = lax.broadcasted_iota(jnp.int32, (B, B * S), 0).astype(jnp.float32)
    smat = (colf == rowf * S + lengths).astype(jnp.float32)           # (B, B*S)
    sel = jnp.dot(smat, x2, preferred_element_type=jnp.float32)       # (B, H)

    # ---- classifier (full 128-lane panel) + sigmoid + BCE-style loss --------
    logits = (jnp.dot(sel, wh[:, _C:_C + LANES], preferred_element_type=jnp.float32)
              + vec[_BC:_BC + 1, :])                                  # (B, 128); cols>=2 are 0
    prob = 1.0 / (1.0 + jnp.exp(-logits))                             # (B, 128)

    p0 = prob[:, 0:1]
    lv = jnp.log(p0 + 1e-10) * lab + jnp.log(1.0 - p0 + 1e-10) * (1.0 - lab)
    loss = -jnp.sum(lv, axis=0, keepdims=True) * (1.0 / B)            # (1, 1)

    # single lane-dense (8,128) store: rows 0..B-1 = prob, rows B..7 = loss
    out_ref[...] = jnp.concatenate(
        [prob, jnp.broadcast_to(loss, (8 - B, LANES))], axis=0)


# ----------------------------------------------------------------------------
# One-time host-side weight packing (NOT on the per-call path)
# ----------------------------------------------------------------------------
def pack_params(params, emb, pos_emb):
    def panel(w):
        w = np.asarray(w, np.float32)
        out = np.zeros((H, LANES), np.float32)
        out[:w.shape[0], :w.shape[1]] = w
        return out

    # (H, 768): [wq|wk|wv|wo|w1|wc], one 128-lane panel each
    w_h = np.concatenate([panel(params['wq']), panel(params['wk']), panel(params['wv']),
                          panel(params['wo']), panel(params['w1']), panel(params['wc'])],
                         axis=1)

    assert V <= VP and F == VP
    emb_p = np.zeros((VP, LANES), np.float32)
    emb_p[:V, :H] = np.asarray(emb, np.float32)
    w2_p = np.zeros((VP, LANES), np.float32)
    w2_p[:F, :H] = np.asarray(params['w2'], np.float32)
    w_v = np.concatenate([emb_p, w2_p], axis=1)            # (VP, 256): [emb | w2]

    vec = np.zeros((VEC_ROWS, LANES), np.float32)
    vec[0:B * S, 0:H] = np.tile(np.asarray(pos_emb, np.float32), (B, 1))
    names = ['bq', 'bk', 'bv', 'bo', 'b1', 'b2', 'ln1g', 'ln1b', 'ln2g', 'ln2b', 'bc']
    for row, name in zip(range(_BQ, _BC + 1), names):
        v = np.asarray(params[name], np.float32).reshape(-1)
        vec[row, :v.shape[0]] = v
    return jnp.asarray(w_h), jnp.asarray(w_v), jnp.asarray(vec)


# ----------------------------------------------------------------------------
# Forward wrapper: one fused pallas_call, only trivial int32 reshapes around it
# ----------------------------------------------------------------------------
@jax.jit
def model_forward(input_ids, labels, w_h, w_v, vec):
    ids_col = input_ids.reshape(B * S, 1)     # tiny int32 relayout for embedding one-hot
    lab_col = labels.reshape(B, 1)
    out = pl.pallas_call(
        fused_model_kernel,
        out_shape=jax.ShapeDtypeStruct((8, LANES), jnp.float32),
    )(input_ids, ids_col, lab_col, w_h, w_v, vec)
    prob = out[0:B, 0:NUM_LABELS]
    loss = out[B, 0]
    return loss, prob


# ----------------------------------------------------------------------------
# Pure-JAX reference (correctness check)
# ----------------------------------------------------------------------------
def ref_forward(input_ids, labels, emb, pos_emb, p):
    x = emb[input_ids] + pos_emb[None]
    mask = input_ids != PAD_ID
    bias = jnp.where(mask, 0.0, -1e9)[:, None, :]

    def ln(y, g, b):
        mu = y.mean(-1, keepdims=True)
        var = ((y - mu) ** 2).mean(-1, keepdims=True)
        return (y - mu) * lax.rsqrt(var + 1e-5) * g + b

    q = x @ p['wq'] + p['bq']
    k = x @ p['wk'] + p['bk']
    v = x @ p['wv'] + p['bv']
    s = jnp.einsum('bqh,bkh->bqk', q, k) / jnp.sqrt(jnp.float32(H)) + bias
    a = jax.nn.softmax(s, axis=-1)
    ctx = jnp.einsum('bqk,bkh->bqh', a, v)
    x1 = ln(x + ctx @ p['wo'] + p['bo'], p['ln1g'], p['ln1b'])
    h = jax.nn.gelu(x1 @ p['w1'] + p['b1'], approximate=True)
    x2 = ln(x1 + h @ p['w2'] + p['b2'], p['ln2g'], p['ln2b'])

    lengths = mask.sum(-1) - 1
    sel = x2[jnp.arange(input_ids.shape[0]), lengths]
    logits = sel @ p['wc'] + p['bc']
    prob = jax.nn.sigmoid(logits)
    lab = labels.astype(jnp.float32)
    lv = (jnp.log(prob[:, 0] + 1e-10) * lab
          + jnp.log(1.0 - prob[:, 0] + 1e-10) * (1.0 - lab))
    return -lv.mean(), prob


# ----------------------------------------------------------------------------
if __name__ == "__main__":
    key = jax.random.PRNGKey(0)
    ks = jax.random.split(key, 24)

    def w(k, shape, scale=0.02):
        return (scale * jax.random.normal(k, shape)).astype(jnp.float32)

    params = {
        'wq': w(ks[0], (H, H)),  'bq': jnp.zeros((1, H), jnp.float32),
        'wk': w(ks[1], (H, H)),  'bk': jnp.zeros((1, H), jnp.float32),
        'wv': w(ks[2], (H, H)),  'bv': jnp.zeros((1, H), jnp.float32),
        'wo': w(ks[3], (H, H)),  'bo': jnp.zeros((1, H), jnp.float32),
        'ln1g': jnp.ones((1, H), jnp.float32), 'ln1b': jnp.zeros((1, H), jnp.float32),
        'w1': w(ks[4], (H, F)),  'b1': jnp.zeros((1, F), jnp.float32),
        'w2': w(ks[5], (F, H)),  'b2': jnp.zeros((1, H), jnp.float32),
        'ln2g': jnp.ones((1, H), jnp.float32), 'ln2b': jnp.zeros((1, H), jnp.float32),
        'wc': w(ks[6], (H, NUM_LABELS)), 'bc': jnp.zeros((1, NUM_LABELS), jnp.float32),
    }
    emb = w(ks[7], (V, H), scale=0.1)
    pos_emb = w(ks[8], (S, H), scale=0.1)

    # deterministic input_ids with trailing padding (row 0: 3 pads, row 1: 1 pad)
    ids = jax.random.randint(ks[9], (B, S), 2, V, dtype=jnp.int32)
    pos = jnp.arange(S)[None, :]
    pad_from = jnp.array([[S - 3], [S - 1]], dtype=jnp.int32)
    input_ids = jnp.where(pos >= pad_from, PAD_ID, ids)
    labels = jnp.array([1, 0], dtype=jnp.int32)

    # one-time weight packing (off the per-call critical path)
    w_h, w_v, vec = pack_params(params, emb, pos_emb)

    loss, prob = model_forward(input_ids, labels, w_h, w_v, vec)
    jax.block_until_ready((loss, prob))

    ref_loss, ref_prob = ref_forward(input_ids, labels, emb, pos_emb, params)
    np.testing.assert_allclose(np.asarray(prob), np.asarray(ref_prob),
                               rtol=1e-3, atol=2e-4)
    np.testing.assert_allclose(np.asarray(loss), np.asarray(ref_loss),
                               rtol=1e-3, atol=2e-4)
    print("KERNEL_OK")
</pallas_src>

<mosaic_0001>
module attributes {stable_mosaic.version = 11 : i64} {
  func.func @fused_model_kernel(%arg0: memref<2x8xi32, #tpu.memory_space<vmem>>, %arg1: memref<16x1xi32, #tpu.memory_space<vmem>>, %arg2: memref<2x1xi32, #tpu.memory_space<vmem>>, %arg3: memref<32x768xf32, #tpu.memory_space<vmem>>, %arg4: memref<64x256xf32, #tpu.memory_space<vmem>>, %arg5: memref<32x128xf32, #tpu.memory_space<vmem>>, %arg6: memref<8x128xf32, #tpu.memory_space<vmem>>) attributes {dimension_semantics = [], scalar_prefetch = 0 : i64, scratch_operands = 0 : i64, tpu.core_type = #tpu.core_type<tc>} {
    %c0 = arith.constant 0 : index
    %c0_0 = arith.constant 0 : index
    %0 = vector.load %arg0[%c0, %c0_0] : memref<2x8xi32, #tpu.memory_space<vmem>>, vector<2x8xi32>
    %c0_1 = arith.constant 0 : index
    %c0_2 = arith.constant 0 : index
    %1 = vector.load %arg1[%c0_1, %c0_2] : memref<16x1xi32, #tpu.memory_space<vmem>>, vector<16x1xi32>
    %c0_3 = arith.constant 0 : index
    %c0_4 = arith.constant 0 : index
    %2 = vector.load %arg2[%c0_3, %c0_4] : memref<2x1xi32, #tpu.memory_space<vmem>>, vector<2x1xi32>
    %3 = arith.sitofp %2 : vector<2x1xi32> to vector<2x1xf32>
    %c0_5 = arith.constant 0 : index
    %c0_6 = arith.constant 0 : index
    %4 = vector.load %arg3[%c0_5, %c0_6] : memref<32x768xf32, #tpu.memory_space<vmem>>, vector<32x768xf32>
    %c0_7 = arith.constant 0 : index
    %c0_8 = arith.constant 0 : index
    %5 = vector.load %arg4[%c0_7, %c0_8] : memref<64x256xf32, #tpu.memory_space<vmem>>, vector<64x256xf32>
    %c0_9 = arith.constant 0 : index
    %c0_10 = arith.constant 0 : index
    %6 = vector.load %arg5[%c0_9, %c0_10] : memref<32x128xf32, #tpu.memory_space<vmem>>, vector<32x128xf32>
    %c1_i32 = arith.constant 1 : i32
    %7 = vector.broadcast %c1_i32 : i32 to vector<2x8xi32>
    %8 = arith.cmpi ne, %0, %7 : vector<2x8xi32>
    %9 = arith.extui %8 : vector<2x8xi1> to vector<2x8xi32>
    %10 = arith.sitofp %9 : vector<2x8xi32> to vector<2x8xf32>
    %cst = arith.constant 1.000000e+00 : f32
    %11 = vector.broadcast %cst : f32 to vector<2x8xf32>
    %12 = arith.subf %10, %11 : vector<2x8xf32>
    %cst_11 = arith.constant 1.000000e+09 : f32
    %13 = vector.broadcast %cst_11 : f32 to vector<2x8xf32>
    %14 = arith.mulf %12, %13 : vector<2x8xf32>
    %cst_12 = arith.constant dense<0.000000e+00> : vector<2xf32>
    %15 = vector.multi_reduction <add>, %10, %cst_12 [1] : vector<2x8xf32> to vector<2xf32>
    %16 = vector.shape_cast %15 : vector<2xf32> to vector<2x1xf32>
    %cst_13 = arith.constant 1.000000e+00 : f32
    %17 = vector.broadcast %cst_13 : f32 to vector<2x1xf32>
    %18 = arith.subf %16, %17 : vector<2x1xf32>
    %cst_14 = arith.constant 0.000000e+00 : f32
    %19 = vector.broadcast %cst_14 : f32 to vector<2x1xf32>
    %20 = arith.cmpf olt, %18, %19 : vector<2x1xf32>
    %cst_15 = arith.constant 7.000000e+00 : f32
    %21 = vector.broadcast %cst_15 : f32 to vector<2x1xf32>
    %22 = arith.select %20, %21, %18 : vector<2x1xi1>, vector<2x1xf32>
    %23 = tpu.iota {dimensions = array<i32: 1>} : vector<16x64xi32>
    %24 = vector.broadcast %1 : vector<16x1xi32> to vector<16x64xi32>
    %25 = arith.cmpi eq, %23, %24 : vector<16x64xi32>
    %26 = arith.extui %25 : vector<16x64xi1> to vector<16x64xi32>
    %27 = arith.sitofp %26 : vector<16x64xi32> to vector<16x64xf32>
    %28 = vector.extract_strided_slice %5 {offsets = [0, 0], sizes = [64, 32], strides = [1, 1]} : vector<64x256xf32> to vector<64x32xf32>
    %cst_16 = arith.constant dense<0.000000e+00> : vector<16x32xf32>
    %29 = tpu.matmul %27, %28, %cst_16 {dimension_numbers = #tpu.dot_dimension_numbers<[1], [0], [0], [1], [0, 0, 1, 1], [], []>} : vector<16x64xf32>, vector<64x32xf32>, vector<16x32xf32> -> vector<16x32xf32>
    %30 = vector.extract_strided_slice %6 {offsets = [0, 0], sizes = [16, 32], strides = [1, 1]} : vector<32x128xf32> to vector<16x32xf32>
    %31 = arith.addf %29, %30 : vector<16x32xf32>
    %32 = vector.extract_strided_slice %4 {offsets = [0, 0], sizes = [32, 384], strides = [1, 1]} : vector<32x768xf32> to vector<32x384xf32>
    %cst_17 = arith.constant dense<0.000000e+00> : vector<16x384xf32>
    %33 = tpu.matmul %31, %32, %cst_17 {dimension_numbers = #tpu.dot_dimension_numbers<[1], [0], [0], [1], [0, 0, 1, 1], [], []>} : vector<16x32xf32>, vector<32x384xf32>, vector<16x384xf32> -> vector<16x384xf32>
    %34 = vector.extract_strided_slice %6 {offsets = [16, 0], sizes = [1, 32], strides = [1, 1]} : vector<32x128xf32> to vector<1x32xf32>
    %35 = vector.extract_strided_slice %6 {offsets = [17, 0], sizes = [1, 32], strides = [1, 1]} : vector<32x128xf32> to vector<1x32xf32>
    %36 = vector.extract_strided_slice %6 {offsets = [18, 0], sizes = [1, 32], strides = [1, 1]} : vector<32x128xf32> to vector<1x32xf32>
    %37 = vector.extract_strided_slice %33 {offsets = [0, 0], sizes = [8, 32], strides = [1, 1]} : vector<16x384xf32> to vector<8x32xf32>
    %38 = vector.broadcast %34 : vector<1x32xf32> to vector<8x32xf32>
    %39 = arith.addf %37, %38 : vector<8x32xf32>
    %40 = vector.extract_strided_slice %33 {offsets = [0, 128], sizes = [8, 32], strides = [1, 1]} : vector<16x384xf32> to vector<8x32xf32>
    %41 = vector.broadcast %35 : vector<1x32xf32> to vector<8x32xf32>
    %42 = arith.addf %40, %41 : vector<8x32xf32>
    %43 = vector.extract_strided_slice %33 {offsets = [0, 256], sizes = [8, 32], strides = [1, 1]} : vector<16x384xf32> to vector<8x32xf32>
    %44 = vector.broadcast %36 : vector<1x32xf32> to vector<8x32xf32>
    %45 = arith.addf %43, %44 : vector<8x32xf32>
    %cst_18 = arith.constant dense<0.000000e+00> : vector<8x8xf32>
    %46 = tpu.matmul %39, %42, %cst_18 {dimension_numbers = #tpu.dot_dimension_numbers<[1], [1], [0], [0], [0, 0, 1, 0], [], []>} : vector<8x32xf32>, vector<8x32xf32>, vector<8x8xf32> -> vector<8x8xf32>
    %cst_19 = arith.constant 0.176776692 : f32
    %47 = vector.broadcast %cst_19 : f32 to vector<8x8xf32>
    %48 = arith.mulf %46, %47 : vector<8x8xf32>
    %49 = vector.extract_strided_slice %14 {offsets = [0, 0], sizes = [1, 8], strides = [1, 1]} : vector<2x8xf32> to vector<1x8xf32>
    %50 = vector.broadcast %49 : vector<1x8xf32> to vector<8x8xf32>
    %51 = arith.addf %48, %50 : vector<8x8xf32>
    %cst_20 = arith.constant dense<0xFF800000> : vector<8xf32>
    %52 = vector.multi_reduction <maximumf>, %51, %cst_20 [1] : vector<8x8xf32> to vector<8xf32>
    %53 = vector.shape_cast %52 : vector<8xf32> to vector<8x1xf32>
    %54 = vector.broadcast %53 : vector<8x1xf32> to vector<8x8xf32>
    %55 = arith.subf %51, %54 : vector<8x8xf32>
    %56 = math.exp %55 : vector<8x8xf32>
    %cst_21 = arith.constant dense<0.000000e+00> : vector<8xf32>
    %57 = vector.multi_reduction <add>, %56, %cst_21 [1] : vector<8x8xf32> to vector<8xf32>
    %58 = vector.shape_cast %57 : vector<8xf32> to vector<8x1xf32>
    %59 = tpu.reciprocal %58 {approx = true} : vector<8x1xf32> -> vector<8x1xf32>
    %60 = vector.broadcast %59 : vector<8x1xf32> to vector<8x8xf32>
    %61 = arith.mulf %56, %60 : vector<8x8xf32>
    %cst_22 = arith.constant dense<0.000000e+00> : vector<8x32xf32>
    %62 = tpu.matmul %61, %45, %cst_22 {dimension_numbers = #tpu.dot_dimension_numbers<[1], [0], [0], [1], [0, 0, 1, 1], [], []>} : vector<8x8xf32>, vector<8x32xf32>, vector<8x32xf32> -> vector<8x32xf32>
    %63 = vector.extract_strided_slice %33 {offsets = [8, 0], sizes = [8, 32], strides = [1, 1]} : vector<16x384xf32> to vector<8x32xf32>
    %64 = vector.broadcast %34 : vector<1x32xf32> to vector<8x32xf32>
    %65 = arith.addf %63, %64 : vector<8x32xf32>
    %66 = vector.extract_strided_slice %33 {offsets = [8, 128], sizes = [8, 32], strides = [1, 1]} : vector<16x384xf32> to vector<8x32xf32>
    %67 = vector.broadcast %35 : vector<1x32xf32> to vector<8x32xf32>
    %68 = arith.addf %66, %67 : vector<8x32xf32>
    %69 = vector.extract_strided_slice %33 {offsets = [8, 256], sizes = [8, 32], strides = [1, 1]} : vector<16x384xf32> to vector<8x32xf32>
    %70 = vector.broadcast %36 : vector<1x32xf32> to vector<8x32xf32>
    %71 = arith.addf %69, %70 : vector<8x32xf32>
    %cst_23 = arith.constant dense<0.000000e+00> : vector<8x8xf32>
    %72 = tpu.matmul %65, %68, %cst_23 {dimension_numbers = #tpu.dot_dimension_numbers<[1], [1], [0], [0], [0, 0, 1, 0], [], []>} : vector<8x32xf32>, vector<8x32xf32>, vector<8x8xf32> -> vector<8x8xf32>
    %cst_24 = arith.constant 0.176776692 : f32
    %73 = vector.broadcast %cst_24 : f32 to vector<8x8xf32>
    %74 = arith.mulf %72, %73 : vector<8x8xf32>
    %75 = vector.extract_strided_slice %14 {offsets = [1, 0], sizes = [1, 8], strides = [1, 1]} : vector<2x8xf32> to vector<1x8xf32>
    %76 = vector.broadcast %75 : vector<1x8xf32> to vector<8x8xf32>
    %77 = arith.addf %74, %76 : vector<8x8xf32>
    %cst_25 = arith.constant dense<0xFF800000> : vector<8xf32>
    %78 = vector.multi_reduction <maximumf>, %77, %cst_25 [1] : vector<8x8xf32> to vector<8xf32>
    %79 = vector.shape_cast %78 : vector<8xf32> to vector<8x1xf32>
    %80 = vector.broadcast %79 : vector<8x1xf32> to vector<8x8xf32>
    %81 = arith.subf %77, %80 : vector<8x8xf32>
    %82 = math.exp %81 : vector<8x8xf32>
    %cst_26 = arith.constant dense<0.000000e+00> : vector<8xf32>
    %83 = vector.multi_reduction <add>, %82, %cst_26 [1] : vector<8x8xf32> to vector<8xf32>
    %84 = vector.shape_cast %83 : vector<8xf32> to vector<8x1xf32>
    %85 = tpu.reciprocal %84 {approx = true} : vector<8x1xf32> -> vector<8x1xf32>
    %86 = vector.broadcast %85 : vector<8x1xf32> to vector<8x8xf32>
    %87 = arith.mulf %82, %86 : vector<8x8xf32>
    %cst_27 = arith.constant dense<0.000000e+00> : vector<8x32xf32>
    %88 = tpu.matmul %87, %71, %cst_27 {dimension_numbers = #tpu.dot_dimension_numbers<[1], [0], [0], [1], [0, 0, 1, 1], [], []>} : vector<8x8xf32>, vector<8x32xf32>, vector<8x32xf32> -> vector<8x32xf32>
    %89 = tpu.concatenate %62, %88 in 0 : vector<8x32xf32>, vector<8x32xf32> -> vector<16x32xf32>
    %90 = vector.extract_strided_slice %4 {offsets = [0, 384], sizes = [32, 32], strides = [1, 1]} : vector<32x768xf32> to vector<32x32xf32>
    %cst_28 = arith.constant dense<0.000000e+00> : vector<16x32xf32>
    %91 = tpu.matmul %89, %90, %cst_28 {dimension_numbers = #tpu.dot_dimension_numbers<[1], [0], [0], [1], [0, 0, 1, 1], [], []>} : vector<16x32xf32>, vector<32x32xf32>, vector<16x32xf32> -> vector<16x32xf32>
    %92 = vector.extract_strided_slice %6 {offsets = [19, 0], sizes = [1, 32], strides = [1, 1]} : vector<32x128xf32> to vector<1x32xf32>
    %93 = vector.broadcast %92 : vector<1x32xf32> to vector<16x32xf32>
    %94 = arith.addf %91, %93 : vector<16x32xf32>
    %95 = arith.addf %31, %94 : vector<16x32xf32>
    %96 = vector.extract_strided_slice %6 {offsets = [22, 0], sizes = [1, 32], strides = [1, 1]} : vector<32x128xf32> to vector<1x32xf32>
    %97 = vector.extract_strided_slice %6 {offsets = [23, 0], sizes = [1, 32], strides = [1, 1]} : vector<32x128xf32> to vector<1x32xf32>
    %cst_29 = arith.constant dense<0.000000e+00> : vector<16xf32>
    %98 = vector.multi_reduction <add>, %95, %cst_29 [1] : vector<16x32xf32> to vector<16xf32>
    %99 = vector.shape_cast %98 : vector<16xf32> to vector<16x1xf32>
    %cst_30 = arith.constant 3.200000e+01 : f32
    %100 = vector.broadcast %cst_30 : f32 to vector<16x1xf32>
    %101 = arith.divf %99, %100 : vector<16x1xf32>
    %102 = vector.broadcast %101 : vector<16x1xf32> to vector<16x32xf32>
    %103 = arith.subf %95, %102 : vector<16x32xf32>
    %104 = arith.mulf %103, %103 : vector<16x32xf32>
    %cst_31 = arith.constant dense<0.000000e+00> : vector<16xf32>
    %105 = vector.multi_reduction <add>, %104, %cst_31 [1] : vector<16x32xf32> to vector<16xf32>
    %106 = vector.shape_cast %105 : vector<16xf32> to vector<16x1xf32>
    %cst_32 = arith.constant 3.200000e+01 : f32
    %107 = vector.broadcast %cst_32 : f32 to vector<16x1xf32>
    %108 = arith.divf %106, %107 : vector<16x1xf32>
    %109 = vector.broadcast %101 : vector<16x1xf32> to vector<16x32xf32>
    %110 = arith.subf %95, %109 : vector<16x32xf32>
    %cst_33 = arith.constant 9.99999974E-6 : f32
    %111 = vector.broadcast %cst_33 : f32 to vector<16x1xf32>
    %112 = arith.addf %108, %111 : vector<16x1xf32>
    %113 = math.rsqrt %112 : vector<16x1xf32>
    %114 = vector.broadcast %113 : vector<16x1xf32> to vector<16x32xf32>
    %115 = arith.mulf %110, %114 : vector<16x32xf32>
    %116 = vector.broadcast %96 : vector<1x32xf32> to vector<16x32xf32>
    %117 = arith.mulf %115, %116 : vector<16x32xf32>
    %118 = vector.broadcast %97 : vector<1x32xf32> to vector<16x32xf32>
    %119 = arith.addf %117, %118 : vector<16x32xf32>
    %120 = vector.extract_strided_slice %4 {offsets = [0, 512], sizes = [32, 64], strides = [1, 1]} : vector<32x768xf32> to vector<32x64xf32>
    %cst_34 = arith.constant dense<0.000000e+00> : vector<16x64xf32>
    %121 = tpu.matmul %119, %120, %cst_34 {dimension_numbers = #tpu.dot_dimension_numbers<[1], [0], [0], [1], [0, 0, 1, 1], [], []>} : vector<16x32xf32>, vector<32x64xf32>, vector<16x64xf32> -> vector<16x64xf32>
    %122 = vector.extract_strided_slice %6 {offsets = [20, 0], sizes = [1, 64], strides = [1, 1]} : vector<32x128xf32> to vector<1x64xf32>
    %123 = vector.broadcast %122 : vector<1x64xf32> to vector<16x64xf32>
    %124 = arith.addf %121, %123 : vector<16x64xf32>
    %125 = arith.mulf %124, %124 : vector<16x64xf32>
    %126 = arith.mulf %124, %125 : vector<16x64xf32>
    %cst_35 = arith.constant 4.471500e-02 : f32
    %127 = vector.broadcast %cst_35 : f32 to vector<16x64xf32>
    %128 = arith.mulf %127, %126 : vector<16x64xf32>
    %129 = arith.addf %124, %128 : vector<16x64xf32>
    %cst_36 = arith.constant 0.797884583 : f32
    %130 = vector.broadcast %cst_36 : f32 to vector<16x64xf32>
    %131 = arith.mulf %130, %129 : vector<16x64xf32>
    %132 = math.tanh %131 : vector<16x64xf32>
    %cst_37 = arith.constant 1.000000e+00 : f32
    %133 = vector.broadcast %cst_37 : f32 to vector<16x64xf32>
    %134 = arith.addf %133, %132 : vector<16x64xf32>
    %cst_38 = arith.constant 5.000000e-01 : f32
    %135 = vector.broadcast %cst_38 : f32 to vector<16x64xf32>
    %136 = arith.mulf %135, %134 : vector<16x64xf32>
    %137 = arith.mulf %124, %136 : vector<16x64xf32>
    %138 = vector.extract_strided_slice %5 {offsets = [0, 128], sizes = [64, 32], strides = [1, 1]} : vector<64x256xf32> to vector<64x32xf32>
    %cst_39 = arith.constant dense<0.000000e+00> : vector<16x32xf32>
    %139 = tpu.matmul %137, %138, %cst_39 {dimension_numbers = #tpu.dot_dimension_numbers<[1], [0], [0], [1], [0, 0, 1, 1], [], []>} : vector<16x64xf32>, vector<64x32xf32>, vector<16x32xf32> -> vector<16x32xf32>
    %140 = vector.extract_strided_slice %6 {offsets = [21, 0], sizes = [1, 32], strides = [1, 1]} : vector<32x128xf32> to vector<1x32xf32>
    %141 = vector.broadcast %140 : vector<1x32xf32> to vector<16x32xf32>
    %142 = arith.addf %139, %141 : vector<16x32xf32>
    %143 = arith.addf %119, %142 : vector<16x32xf32>
    %144 = vector.extract_strided_slice %6 {offsets = [24, 0], sizes = [1, 32], strides = [1, 1]} : vector<32x128xf32> to vector<1x32xf32>
    %145 = vector.extract_strided_slice %6 {offsets = [25, 0], sizes = [1, 32], strides = [1, 1]} : vector<32x128xf32> to vector<1x32xf32>
    %cst_40 = arith.constant dense<0.000000e+00> : vector<16xf32>
    %146 = vector.multi_reduction <add>, %143, %cst_40 [1] : vector<16x32xf32> to vector<16xf32>
    %147 = vector.shape_cast %146 : vector<16xf32> to vector<16x1xf32>
    %cst_41 = arith.constant 3.200000e+01 : f32
    %148 = vector.broadcast %cst_41 : f32 to vector<16x1xf32>
    %149 = arith.divf %147, %148 : vector<16x1xf32>
    %150 = vector.broadcast %149 : vector<16x1xf32> to vector<16x32xf32>
    %151 = arith.subf %143, %150 : vector<16x32xf32>
    %152 = arith.mulf %151, %151 : vector<16x32xf32>
    %cst_42 = arith.constant dense<0.000000e+00> : vector<16xf32>
    %153 = vector.multi_reduction <add>, %152, %cst_42 [1] : vector<16x32xf32> to vector<16xf32>
    %154 = vector.shape_cast %153 : vector<16xf32> to vector<16x1xf32>
    %cst_43 = arith.constant 3.200000e+01 : f32
    %155 = vector.broadcast %cst_43 : f32 to vector<16x1xf32>
    %156 = arith.divf %154, %155 : vector<16x1xf32>
    %157 = vector.broadcast %149 : vector<16x1xf32> to vector<16x32xf32>
    %158 = arith.subf %143, %157 : vector<16x32xf32>
    %cst_44 = arith.constant 9.99999974E-6 : f32
    %159 = vector.broadcast %cst_44 : f32 to vector<16x1xf32>
    %160 = arith.addf %156, %159 : vector<16x1xf32>
    %161 = math.rsqrt %160 : vector<16x1xf32>
    %162 = vector.broadcast %161 : vector<16x1xf32> to vector<16x32xf32>
    %163 = arith.mulf %158, %162 : vector<16x32xf32>
    %164 = vector.broadcast %144 : vector<1x32xf32> to vector<16x32xf32>
    %165 = arith.mulf %163, %164 : vector<16x32xf32>
    %166 = vector.broadcast %145 : vector<1x32xf32> to vector<16x32xf32>
    %167 = arith.addf %165, %166 : vector<16x32xf32>
    %168 = tpu.iota {dimensions = array<i32: 1>} : vector<2x16xi32>
    %169 = arith.sitofp %168 : vector<2x16xi32> to vector<2x16xf32>
    %170 = tpu.iota {dimensions = array<i32: 0>} : vector<2x16xi32>
    %171 = arith.sitofp %170 : vector<2x16xi32> to vector<2x16xf32>
    %cst_45 = arith.constant 8.000000e+00 : f32
    %172 = vector.broadcast %cst_45 : f32 to vector<2x16xf32>
    %173 = arith.mulf %171, %172 : vector<2x16xf32>
    %174 = vector.broadcast %22 : vector<2x1xf32> to vector<2x16xf32>
    %175 = arith.addf %173, %174 : vector<2x16xf32>
    %176 = arith.cmpf oeq, %169, %175 : vector<2x16xf32>
    %177 = arith.extui %176 : vector<2x16xi1> to vector<2x16xi32>
    %178 = arith.sitofp %177 : vector<2x16xi32> to vector<2x16xf32>
    %cst_46 = arith.constant dense<0.000000e+00> : vector<2x32xf32>
    %179 = tpu.matmul %178, %167, %cst_46 {dimension_numbers = #tpu.dot_dimension_numbers<[1], [0], [0], [1], [0, 0, 1, 1], [], []>} : vector<2x16xf32>, vector<16x32xf32>, vector<2x32xf32> -> vector<2x32xf32>
    %180 = vector.extract_strided_slice %4 {offsets = [0, 640], sizes = [32, 128], strides = [1, 1]} : vector<32x768xf32> to vector<32x128xf32>
    %cst_47 = arith.constant dense<0.000000e+00> : vector<2x128xf32>
    %181 = tpu.matmul %179, %180, %cst_47 {dimension_numbers = #tpu.dot_dimension_numbers<[1], [0], [0], [1], [0, 0, 1, 1], [], []>} : vector<2x32xf32>, vector<32x128xf32>, vector<2x128xf32> -> vector<2x128xf32>
    %182 = vector.extract_strided_slice %6 {offsets = [26, 0], sizes = [1, 128], strides = [1, 1]} : vector<32x128xf32> to vector<1x128xf32>
    %183 = vector.broadcast %182 : vector<1x128xf32> to vector<2x128xf32>
    %184 = arith.addf %181, %183 : vector<2x128xf32>
    %cst_48 = arith.constant 0.000000e+00 : f32
    %185 = vector.broadcast %cst_48 : f32 to vector<2x128xf32>
    %186 = arith.subf %185, %184 : vector<2x128xf32>
    %187 = math.exp %186 : vector<2x128xf32>
    %cst_49 = arith.constant 1.000000e+00 : f32
    %188 = vector.broadcast %cst_49 : f32 to vector<2x128xf32>
    %189 = arith.addf %188, %187 : vector<2x128xf32>
    %cst_50 = arith.constant 1.000000e+00 : f32
    %190 = vector.broadcast %cst_50 : f32 to vector<2x128xf32>
    %191 = arith.divf %190, %189 : vector<2x128xf32>
    %192 = vector.extract_strided_slice %191 {offsets = [0, 0], sizes = [2, 1], strides = [1, 1]} : vector<2x128xf32> to vector<2x1xf32>
    %cst_51 = arith.constant 1.000000e-10 : f32
    %193 = vector.broadcast %cst_51 : f32 to vector<2x1xf32>
    %194 = arith.addf %192, %193 : vector<2x1xf32>
    %195 = math.log %194 : vector<2x1xf32>
    %196 = arith.mulf %195, %3 : vector<2x1xf32>
    %cst_52 = arith.constant 1.000000e+00 : f32
    %197 = vector.broadcast %cst_52 : f32 to vector<2x1xf32>
    %198 = arith.subf %197, %192 : vector<2x1xf32>
    %cst_53 = arith.constant 1.000000e-10 : f32
    %199 = vector.broadcast %cst_53 : f32 to vector<2x1xf32>
    %200 = arith.addf %198, %199 : vector<2x1xf32>
    %201 = math.log %200 : vector<2x1xf32>
    %cst_54 = arith.constant 1.000000e+00 : f32
    %202 = vector.broadcast %cst_54 : f32 to vector<2x1xf32>
    %203 = arith.subf %202, %3 : vector<2x1xf32>
    %204 = arith.mulf %201, %203 : vector<2x1xf32>
    %205 = arith.addf %196, %204 : vector<2x1xf32>
    %cst_55 = arith.constant dense<0.000000e+00> : vector<1xf32>
    %206 = vector.multi_reduction <add>, %205, %cst_55 [0] : vector<2x1xf32> to vector<1xf32>
    %207 = vector.shape_cast %206 : vector<1xf32> to vector<1x1xf32>
    %cst_56 = arith.constant 0.000000e+00 : f32
    %208 = vector.broadcast %cst_56 : f32 to vector<1x1xf32>
    %209 = arith.subf %208, %207 : vector<1x1xf32>
    %cst_57 = arith.constant 5.000000e-01 : f32
    %210 = vector.broadcast %cst_57 : f32 to vector<1x1xf32>
    %211 = arith.mulf %209, %210 : vector<1x1xf32>
    %212 = vector.shape_cast %211 : vector<1x1xf32> to vector<1x1xf32>
    %213 = vector.broadcast %212 : vector<1x1xf32> to vector<6x128xf32>
    %214 = tpu.concatenate %191, %213 in 0 : vector<2x128xf32>, vector<6x128xf32> -> vector<8x128xf32>
    %c0_58 = arith.constant 0 : index
    %c0_59 = arith.constant 0 : index
    %215 = vector.load %arg6[%c0_58, %c0_59] : memref<8x128xf32, #tpu.memory_space<vmem>>, vector<8x128xf32>
    tpu.vector_store %arg6[%c0_58, %c0_59], %214 {strides = array<i32>} : memref<8x128xf32, #tpu.memory_space<vmem>>, vector<8x128xf32>,
    return
  }
}

</mosaic_0001>

<llo_original>
// kernel: model_forward.1
$region0: #{model_forward.1}
  #allocation0 [shape = 'u32[]', space=smem, size = 0x4, offset = 0x4, fixed_abs, tag = 'smem constant byte address 0x4 - core index']
  #allocation1 [shape = 'u32[144,128]{1,0:T(1,128)}', space=vmem, size = 0x12000, scoped, tag = 'internal scratch']
  %s0 = inlined_call_operand.vmem [shape: s32[2,8], index: 0, kind: input, shape index: {}]
  %s1 = inlined_call_operand.vmem [shape: s32[16,1], index: 1, kind: input, shape index: {}]
  %s2 = inlined_call_operand.vmem [shape: s32[2,1], index: 2, kind: input, shape index: {}]
  %s3 = inlined_call_operand.hbm [shape: f32[32,768], index: 3, kind: input, shape index: {}]
  %s4 = inlined_call_operand.hbm [shape: f32[64,256], index: 4, kind: input, shape index: {}]
  %s5 = inlined_call_operand.hbm [shape: f32[32,128], index: 5, kind: input, shape index: {}]
  %s6 = inlined_call_operand.vmem [shape: f32[8,128], index: 6, kind: output, shape index: {}]
  %s7 = sld [smem:[#allocation0]]
  $region46: #{model_forward.1} parent=0
    _
  %s9 = ssub.s32 1, %s7
  %s10 = scalar_select 0, %s9, %s7
  $region1: #{model_forward.1} parent=0
    #allocation2 [shape = 'u8[98304]{0}', space=vmem, size = 0x18000, scoped, tag = 'input window, operand 3, single buffered']
    #allocation3 [shape = 's32[1]{0}', space=sflag, size = 0x4, scoped, tag = 'scoped memory for model_forward.1']
    #allocation4 [shape = 'u8[65536]{0}', space=vmem, size = 0x10000, scoped, tag = 'input window, operand 4, single buffered']
    #allocation5 [shape = 's32[1]{0}', space=sflag, size = 0x4, scoped, tag = 'scoped memory for model_forward.1']
    #allocation6 [shape = 'u8[16384]{0}', space=vmem, size = 0x4000, scoped, tag = 'input window, operand 5, single buffered']
    %11 = vsyncpa [#allocation3], 0
    %12 = vsyncpa [#allocation5], 0
    // Predicated region
    $region2: #{model_forward.1} parent=1 // pred_check
      _
    $region3: #{model_forward.1} parent=1 // pred_check_branch
      %14 = sbr.rel (0) target = $region5
    $region4: #{model_forward.1} parent=1 // pred_region
      _
    $region5: #{model_forward.1} parent=1 // pred_fallthru
      _
    // Predicated region
    $region6: #{model_forward.1} parent=1 // pred_check
      _
    $region7: #{model_forward.1} parent=1 // pred_check_branch
      %16 = sbr.rel (0) target = $region9
    $region8: #{model_forward.1} parent=1 // pred_region
      _
    $region9: #{model_forward.1} parent=1 // pred_fallthru
      _
    // Predicated region
    $region10: #{model_forward.1} parent=1 // pred_check
      _
    $region11: #{model_forward.1} parent=1 // pred_check_branch
      %18 = sbr.rel (0) target = $region13
    $region12: #{model_forward.1} parent=1 // pred_region
      _
    $region13: #{model_forward.1} parent=1 // pred_fallthru
      _
    // Predicated region
    $region14: #{model_forward.1} parent=1 // pred_check
      _
    $region15: #{model_forward.1} parent=1 // pred_check_branch
      %20 = sbr.rel (0) target = $region17
    $region16: #{model_forward.1} parent=1 // pred_region
      %s22 = ssub.s32 3072, 3072
      %23 = vsyncadd [#allocation3], %s22
      %s24 = sshll.u32 [#allocation2], 4
      %s25 = int_to_ptr.vmem [resolvable:$true] %s24
      %30 = dma.hbm_to_vmem [thread:$0]  %s3, 3072, %s25, [#allocation3], 768, 768, 48
    $region17: #{model_forward.1} parent=1 // pred_fallthru
      _
    // Predicated region
    $region18: #{model_forward.1} parent=1 // pred_check
      _
    $region19: #{model_forward.1} parent=1 // pred_check_branch
      %32 = sbr.rel (0) target = $region21
    $region20: #{model_forward.1} parent=1 // pred_region
      %s34 = ssub.s32 2048, 2048
      %35 = vsyncadd [#allocation5], %s34
      %s36 = sshll.u32 [#allocation4], 4
      %s37 = int_to_ptr.vmem [resolvable:$true] %s36
      %42 = dma.hbm_to_vmem [thread:$0]  %s4, 2048, %s37, [#allocation5], 256, 256, 16
    $region21: #{model_forward.1} parent=1 // pred_fallthru
      _
    // Predicated region
    $region22: #{model_forward.1} parent=1 // pred_check
      _
    $region23: #{model_forward.1} parent=1 // pred_check_branch
      %44 = sbr.rel (0) target = $region25
    $region24: #{model_forward.1} parent=1 // pred_region
      %s46 = ssub.s32 512, 512
      %47 = vsyncadd [#allocation5], %s46
      %s48 = sshll.u32 [#allocation6], 4
      %s49 = int_to_ptr.vmem [resolvable:$true] %s48
      %54 = dma.hbm_to_vmem [thread:$0]  %s5, 512, %s49, [#allocation5], 128, 128, 8
    $region25: #{model_forward.1} parent=1 // pred_fallthru
      _
    // Predicated region
    $region26: #{model_forward.1} parent=1 // pred_check
      _
    $region27: #{model_forward.1} parent=1 // pred_check_branch
      %56 = sbr.rel (0) target = $region29
    $region28: #{model_forward.1} parent=1 // pred_region
      %57 = dma.done [#allocation3], 3072
    $region29: #{model_forward.1} parent=1 // pred_fallthru
      _
    // Predicated region
    $region30: #{model_forward.1} parent=1 // pred_check
      _
    $region31: #{model_forward.1} parent=1 // pred_check_branch
      %59 = sbr.rel (0) target = $region33
    $region32: #{model_forward.1} parent=1 // pred_region
      %60 = dma.done [#allocation5], 2048
    $region33: #{model_forward.1} parent=1 // pred_fallthru
      _
    // Predicated region
    $region34: #{model_forward.1} parent=1 // pred_check
      _
    $region35: #{model_forward.1} parent=1 // pred_check_branch
      %62 = sbr.rel (0) target = $region37
    $region36: #{model_forward.1} parent=1 // pred_region
      %63 = dma.done [#allocation5], 512
    $region37: #{model_forward.1} parent=1 // pred_fallthru
      _
    %v64 = vld [vmem:[%s0] sm:$0x3]
    %v65 = vld [vmem:[%s1] sm:$0xff]
    %v66 = vld [vmem:[%s1 + $0x8] sm:$0xff]
    %v67 = vld [vmem:[%s2] sm:$0x3]
    %v68 = vcvt.s32.f32 %v67
    %v69 = vld [vmem:[#allocation2] sm:$0xff]
    %v70 = vld [vmem:[#allocation2 + $0x8] sm:$0xff]
    %v71 = vld [vmem:[#allocation2 + $0x10] sm:$0xff]
    %v72 = vld [vmem:[#allocation2 + $0x18] sm:$0xff]
    %v73 = vld [vmem:[#allocation2 + $0x20] sm:$0xff]
    %v74 = vld [vmem:[#allocation2 + $0x28] sm:$0xff]
    %v75 = vld [vmem:[#allocation2 + $0x30] sm:$0xff]
    %v76 = vld [vmem:[#allocation2 + $0x38] sm:$0xff]
    %v77 = vld [vmem:[#allocation2 + $0x40] sm:$0xff]
    %v78 = vld [vmem:[#allocation2 + $0x48] sm:$0xff]
    %v79 = vld [vmem:[#allocation2 + $0x50] sm:$0xff]
    %v80 = vld [vmem:[#allocation2 + $0x58] sm:$0xff]
    %v81 = vld [vmem:[#allocation2 + $0x60] sm:$0xff]
    %v82 = vld [vmem:[#allocation2 + $0x68] sm:$0xff]
    %v83 = vld [vmem:[#allocation2 + $0x70] sm:$0xff]
    %v84 = vld [vmem:[#allocation2 + $0x78] sm:$0xff]
    %v85 = vld [vmem:[#allocation2 + $0x80] sm:$0xff]
    %v86 = vld [vmem:[#allocation2 + $0x88] sm:$0xff]
    %v87 = vld [vmem:[#allocation2 + $0x90] sm:$0xff]
    %v88 = vld [vmem:[#allocation2 + $0x98] sm:$0xff]
    %v89 = vld [vmem:[#allocation2 + $0xa0] sm:$0xff]
    %v90 = vld [vmem:[#allocation2 + $0xa8] sm:$0xff]
    %v91 = vld [vmem:[#allocation2 + $0xb0] sm:$0xff]
    %v92 = vld [vmem:[#allocation2 + $0xb8] sm:$0xff]
    %v93 = vld [vmem:[#allocation4] sm:$0xff]
    %v94 = vld [vmem:[#allocation4 + $0x8] sm:$0xff]
    %v95 = vld [vmem:[#allocation4 + $0x10] sm:$0xff]
    %v96 = vld [vmem:[#allocation4 + $0x18] sm:$0xff]
    %v97 = vld [vmem:[#allocation4 + $0x20] sm:$0xff]
    %v98 = vld [vmem:[#allocation4 + $0x28] sm:$0xff]
    %v99 = vld [vmem:[#allocation4 + $0x30] sm:$0xff]
    %v100 = vld [vmem:[#allocation4 + $0x38] sm:$0xff]
    %v101 = vld [vmem:[#allocation4 + $0x40] sm:$0xff]
    %v102 = vld [vmem:[#allocation4 + $0x48] sm:$0xff]
    %v103 = vld [vmem:[#allocation4 + $0x50] sm:$0xff]
    %v104 = vld [vmem:[#allocation4 + $0x58] sm:$0xff]
    %v105 = vld [vmem:[#allocation4 + $0x60] sm:$0xff]
    %v106 = vld [vmem:[#allocation4 + $0x68] sm:$0xff]
    %v107 = vld [vmem:[#allocation4 + $0x70] sm:$0xff]
    %v108 = vld [vmem:[#allocation4 + $0x78] sm:$0xff]
    %v109 = vld [vmem:[#allocation6] sm:$0xff]
    %v110 = vld [vmem:[#allocation6 + $0x8] sm:$0xff]
    %v111 = vld [vmem:[#allocation6 + $0x10] sm:$0xff]
    %v112 = vld [vmem:[#allocation6 + $0x18] sm:$0xff]
    %vm113 = vcmp.ne.s32.totalorder %v64, 1
    %v114 = vsel %vm113, 1, 0
    %v115 = vcvt.s32.f32 %v114
    %v116 = vsub.f32 %v115, 1.0
    %v117 = vmul.f32 %v116, 1e+09
    %vm118 = vcmask 58368
    %v119 = vsel %vm118, %v115, 0.0
    %120 = vadd.xlane.f32.xlu0 %v119
    %v121 = vpop.xlane.xlu0 %120
    %v122 = vsub.f32 %v121, 1.0
    %vm123 = vcmp.lt.f32.partialorder %v122, 0.0
    %v124 = vsel %vm123, 7.0, %v122
    %v125 = vlaneseq
    %v126 = vand.u32 %v125, 127
    %127 = vset.pattern.permute.xlu0 0
    %128 = vperm.xlu0 %127, %v65
    %v129 = vpop.permute.xlu0 %128
    %130 = vset.pattern.permute.xlu0 0
    %131 = vperm.xlu0 %130, %v66
    %v132 = vpop.permute.xlu0 %131
    %vm133 = vcmp.eq.s32.totalorder %v126, %v129
    %vm134 = vcmp.eq.s32.totalorder %v126, %v132
    %v135 = vsel %vm133, 1, 0
    %v136 = vsel %vm134, 1, 0
    %v137 = vcvt.s32.f32 %v135
    %v138 = vcvt.s32.f32 %v136
    %vm139 = vcmask 523264
    %v141 = vsel %vm139, %v137, 0
    %v144 = vsel %vm139, %v138, 0
    %146 = vmatprep.subr.mxu0 0.0
    %147 = vmatpush1.msra.mxu0 0.0
    %148 = vmatprep.subr.mxu0 0.0
    %149 = vmatpush1.msra.mxu0 0.0
    %150 = vmatprep.subr.mxu0 0.0
    %151 = vmatpush1.msra.mxu0 0.0
    %152 = vmatprep.subr.mxu0 0.0
    %153 = vmatpush1.msra.mxu0 0.0
    %154 = vmatprep.subr.mxu0 0.0
    %155 = vmatpush1.msra.mxu0 0.0
    %156 = vmatprep.subr.mxu0 0.0
    %157 = vmatpush1.msra.mxu0 0.0
    %158 = vmatprep.subr.mxu0 0.0
    %159 = vmatpush1.msra.mxu0 0.0
    %160 = vmatprep.subr.mxu0 0.0
    %161 = vmatpush1.msra.mxu0 0.0
    %162 = vmatprep.subr.mxu0 0.0
    %163 = vmatpush1.msra.mxu0 %v107
    %164 = vmatprep.subr.mxu0 0.0
    %165 = vmatpush1.msra.mxu0 %v105
    %166 = vmatprep.subr.mxu0 0.0
    %167 = vmatpush1.msra.mxu0 %v103
    %168 = vmatprep.subr.mxu0 0.0
    %169 = vmatpush1.msra.mxu0 %v101
    %170 = vmatprep.subr.mxu0 0.0
    %171 = vmatpush1.msra.mxu0 %v99
    %172 = vmatprep.subr.mxu0 0.0
    %173 = vmatpush1.msra.mxu0 %v97
    %174 = vmatprep.subr.mxu0 0.0
    %175 = vmatpush1.msra.mxu0 %v95
    %176 = vmatprep.subr.mxu0 0.0
    %177 = vmatpush1.msra.mxu0 %v93
    %178 = vmatprep.subr.mxu0 0.0
    %179 = vmatpush2.msra.mxu0 0.0
    %180 = vmatprep.subr.mxu0 0.0
    %181 = vmatpush2.msra.mxu0 0.0
    %182 = vmatprep.subr.mxu0 0.0
    %183 = vmatpush2.msra.mxu0 0.0
    %184 = vmatprep.subr.mxu0 0.0
    %185 = vmatpush2.msra.mxu0 0.0
    %186 = vmatprep.subr.mxu0 0.0
    %187 = vmatpush2.msra.mxu0 0.0
    %188 = vmatprep.subr.mxu0 0.0
    %189 = vmatpush2.msra.mxu0 0.0
    %190 = vmatprep.subr.mxu0 0.0
    %191 = vmatpush2.msra.mxu0 0.0
    %192 = vmatprep.subr.mxu0 0.0
    %193 = vmatpush2.msra.mxu0 0.0
    %194 = vmatprep.subr.mxu0 0.0
    %195 = vmatpush2.msra.mxu0 0.0
    %196 = vmatprep.subr.mxu0 0.0
    %197 = vmatpush2.msra.mxu0 0.0
    %198 = vmatprep.subr.mxu0 0.0
    %199 = vmatpush2.msra.mxu0 0.0
    %200 = vmatprep.subr.mxu0 0.0
    %201 = vmatpush2.msra.mxu0 0.0
    %202 = vmatprep.subr.mxu0 0.0
    %203 = vmatpush2.msra.mxu0 0.0
    %204 = vmatprep.subr.mxu0 0.0
    %205 = vmatpush2.msra.mxu0 0.0
    %206 = vmatprep.subr.mxu0 0.0
    %207 = vmatpush2.msra.mxu0 0.0
    %208 = vmatprep.subr.mxu0 0.0
    %209 = vmatpush2.msra.mxu0 0.0
    %210 = vmatprep.mubr.f32.mxu0 0.0
    %211 = vmatmul.mubr.f32.gmra.mxu0 %v141
    %v212 = vpop.f32.mrf.mxu0
    %v213 = vadd.f32 %v109, %v212
    %v214 = vpop.f32.mrf.mxu0
    %215 = vmatprep.mubr.f32.mxu0 0.0
    %216 = vmatmul.mubr.f32.gmra.mxu0 %v144
    %v217 = vpop.f32.mrf.mxu0
    %v218 = vadd.f32 %v110, %v217
    %v219 = vpop.f32.mrf.mxu0
    %220 = vdwg.mxu0
    %vm221 = vcmask 261120
    %v223 = vsel %vm221, %v213, 0
    %v226 = vsel %vm221, %v218, 0
    %228 = vmatprep.subr.mxu0 0.0
    %229 = vmatpush1.msra.mxu0 0.0
    %230 = vmatprep.subr.mxu0 0.0
    %231 = vmatpush1.msra.mxu0 0.0
    %232 = vmatprep.subr.mxu0 0.0
    %233 = vmatpush1.msra.mxu0 0.0
    %234 = vmatprep.subr.mxu0 0.0
    %235 = vmatpush1.msra.mxu0 0.0
    %236 = vmatprep.subr.mxu0 0.0
    %237 = vmatpush1.msra.mxu0 0.0
    %238 = vmatprep.subr.mxu0 0.0
    %239 = vmatpush1.msra.mxu0 0.0
    %240 = vmatprep.subr.mxu0 0.0
    %241 = vmatpush1.msra.mxu0 0.0
    %242 = vmatprep.subr.mxu0 0.0
    %243 = vmatpush1.msra.mxu0 0.0
    %244 = vmatprep.subr.mxu0 0.0
    %245 = vmatpush1.msra.mxu0 0.0
    %246 = vmatprep.subr.mxu0 0.0
    %247 = vmatpush1.msra.mxu0 0.0
    %248 = vmatprep.subr.mxu0 0.0
    %249 = vmatpush1.msra.mxu0 0.0
    %250 = vmatprep.subr.mxu0 0.0
    %251 = vmatpush1.msra.mxu0 0.0
    %252 = vmatprep.subr.mxu0 %v88
    %253 = vmatpush1.msra.mxu0 %v87
    %254 = vmatprep.subr.mxu0 %v82
    %255 = vmatpush1.msra.mxu0 %v81
    %256 = vmatprep.subr.mxu0 %v76
    %257 = vmatpush1.msra.mxu0 %v75
    %258 = vmatprep.subr.mxu0 %v70
    %259 = vmatpush1.msra.mxu0 %v69
    %260 = vmatprep.subr.mxu0 0.0
    %261 = vmatpush2.msra.mxu0 0.0
    %262 = vmatprep.subr.mxu0 0.0
    %263 = vmatpush2.msra.mxu0 0.0
    %264 = vmatprep.subr.mxu0 0.0
    %265 = vmatpush2.msra.mxu0 0.0
    %266 = vmatprep.subr.mxu0 0.0
    %267 = vmatpush2.msra.mxu0 0.0
    %268 = vmatprep.subr.mxu0 0.0
    %269 = vmatpush2.msra.mxu0 0.0
    %270 = vmatprep.subr.mxu0 0.0
    %271 = vmatpush2.msra.mxu0 0.0
    %272 = vmatprep.subr.mxu0 0.0
    %273 = vmatpush2.msra.mxu0 0.0
    %274 = vmatprep.subr.mxu0 0.0
    %275 = vmatpush2.msra.mxu0 0.0
    %276 = vmatprep.subr.mxu0 0.0
    %277 = vmatpush2.msra.mxu0 0.0
    %278 = vmatprep.subr.mxu0 0.0
    %279 = vmatpush2.msra.mxu0 0.0
    %280 = vmatprep.subr.mxu0 0.0
    %281 = vmatpush2.msra.mxu0 0.0
    %282 = vmatprep.subr.mxu0 0.0
    %283 = vmatpush2.msra.mxu0 0.0
    %284 = vmatprep.subr.mxu0 0.0
    %285 = vmatpush2.msra.mxu0 0.0
    %286 = vmatprep.subr.mxu0 0.0
    %287 = vmatpush2.msra.mxu0 0.0
    %288 = vmatprep.subr.mxu0 0.0
    %289 = vmatpush2.msra.mxu0 0.0
    %290 = vmatprep.subr.mxu0 0.0
    %291 = vmatpush2.msra.mxu0 0.0
    %292 = vmatprep.mubr.f32.mxu0 0.0
    %293 = vmatmul.mubr.f32.gmra.mxu0 %v223
    %v294 = vpop.f32.mrf.mxu0
    %v295 = vadd.f32 0.0, %v294
    %v296 = vpop.f32.mrf.mxu0
    %v297 = vadd.f32 0.0, %v296
    %298 = vmatprep.mubr.f32.mxu0 0.0
    %299 = vmatmul.mubr.f32.gmra.mxu0 %v226
    %v300 = vpop.f32.mrf.mxu0
    %v301 = vadd.f32 0.0, %v300
    %v302 = vpop.f32.mrf.mxu0
    %v303 = vadd.f32 0.0, %v302
    %304 = vdwg.mxu0
    %305 = vmatprep.subr.mxu0 0.0
    %306 = vmatpush1.msra.mxu0 0.0
    %307 = vmatprep.subr.mxu0 0.0
    %308 = vmatpush1.msra.mxu0 0.0
    %309 = vmatprep.subr.mxu0 0.0
    %310 = vmatpush1.msra.mxu0 0.0
    %311 = vmatprep.subr.mxu0 0.0
    %312 = vmatpush1.msra.mxu0 0.0
    %313 = vmatprep.subr.mxu0 0.0
    %314 = vmatpush1.msra.mxu0 0.0
    %315 = vmatprep.subr.mxu0 0.0
    %316 = vmatpush1.msra.mxu0 0.0
    %317 = vmatprep.subr.mxu0 0.0
    %318 = vmatpush1.msra.mxu0 0.0
    %319 = vmatprep.subr.mxu0 0.0
    %320 = vmatpush1.msra.mxu0 0.0
    %321 = vmatprep.subr.mxu0 0.0
    %322 = vmatpush1.msra.mxu0 0.0
    %323 = vmatprep.subr.mxu0 0.0
    %324 = vmatpush1.msra.mxu0 0.0
    %325 = vmatprep.subr.mxu0 0.0
    %326 = vmatpush1.msra.mxu0 0.0
    %327 = vmatprep.subr.mxu0 0.0
    %328 = vmatpush1.msra.mxu0 0.0
    %329 = vmatprep.subr.mxu0 0.0
    %330 = vmatpush1.msra.mxu0 %v89
    %331 = vmatprep.subr.mxu0 0.0
    %332 = vmatpush1.msra.mxu0 %v83
    %333 = vmatprep.subr.mxu0 0.0
    %334 = vmatpush1.msra.mxu0 %v77
    %335 = vmatprep.subr.mxu0 0.0
    %336 = vmatpush1.msra.mxu0 %v71
    %337 = vmatprep.subr.mxu0 0.0
    %338 = vmatpush2.msra.mxu0 0.0
    %339 = vmatprep.subr.mxu0 0.0
    %340 = vmatpush2.msra.mxu0 0.0
    %341 = vmatprep.subr.mxu0 0.0
    %342 = vmatpush2.msra.mxu0 0.0
    %343 = vmatprep.subr.mxu0 0.0
    %344 = vmatpush2.msra.mxu0 0.0
    %345 = vmatprep.subr.mxu0 0.0
    %346 = vmatpush2.msra.mxu0 0.0
    %347 = vmatprep.subr.mxu0 0.0
    %348 = vmatpush2.msra.mxu0 0.0
    %349 = vmatprep.subr.mxu0 0.0
    %350 = vmatpush2.msra.mxu0 0.0
    %351 = vmatprep.subr.mxu0 0.0
    %352 = vmatpush2.msra.mxu0 0.0
    %353 = vmatprep.subr.mxu0 0.0
    %354 = vmatpush2.msra.mxu0 0.0
    %355 = vmatprep.subr.mxu0 0.0
    %356 = vmatpush2.msra.mxu0 0.0
    %357 = vmatprep.subr.mxu0 0.0
    %358 = vmatpush2.msra.mxu0 0.0
    %359 = vmatprep.subr.mxu0 0.0
    %360 = vmatpush2.msra.mxu0 0.0
    %361 = vmatprep.subr.mxu0 0.0
    %362 = vmatpush2.msra.mxu0 0.0
    %363 = vmatprep.subr.mxu0 0.0
    %364 = vmatpush2.msra.mxu0 0.0
    %365 = vmatprep.subr.mxu0 0.0
    %366 = vmatpush2.msra.mxu0 0.0
    %367 = vmatprep.subr.mxu0 0.0
    %368 = vmatpush2.msra.mxu0 0.0
    %369 = vmatprep.mubr.f32.mxu0 0.0
    %370 = vmatmul.mubr.f32.gmra.mxu0 %v223
    %v371 = vpop.f32.mrf.mxu0
    %v372 = vadd.f32 0.0, %v371
    %v373 = vpop.f32.mrf.mxu0
    %374 = vmatprep.mubr.f32.mxu0 0.0
    %375 = vmatmul.mubr.f32.gmra.mxu0 %v226
    %v376 = vpop.f32.mrf.mxu0
    %v377 = vadd.f32 0.0, %v376
    %v378 = vpop.f32.mrf.mxu0
    %379 = vdwg.mxu0
    %v380 = vlaneseq
    %v381 = vshrl.u32 %v380, 7
    %v382 = vsub.s32 0, %v381
    %v383 = vrot.slane %v111, %v382
    %v384 = vadd.f32 %v295, %v383
    %v385 = vlaneseq
    %v386 = vshrl.u32 %v385, 7
    %v387 = vsub.s32 1, %v386
    %v388 = vrot.slane %v111, %v387
    %v389 = vadd.f32 %v297, %v388
    %v390 = vlaneseq
    %v391 = vshrl.u32 %v390, 7
    %v392 = vsub.s32 2, %v391
    %v393 = vrot.slane %v111, %v392
    %v394 = vadd.f32 %v372, %v393
    %v396 = vsel %vm221, %v384, 0
    %v399 = vsel %vm221, %v389, 0
    %401 = vmatprep.subr.mxu0 0.0
    %402 = vmatpush1.xpose.msra.mxu0 0.0
    %403 = vmatprep.subr.mxu0 0.0
    %404 = vmatpush1.xpose.msra.mxu0 0.0
    %405 = vmatprep.subr.mxu0 0.0
    %406 = vmatpush1.xpose.msra.mxu0 0.0
    %407 = vmatprep.subr.mxu0 0.0
    %408 = vmatpush1.xpose.msra.mxu0 0.0
    %409 = vmatprep.subr.mxu0 0.0
    %410 = vmatpush1.xpose.msra.mxu0 0.0
    %411 = vmatprep.subr.mxu0 0.0
    %412 = vmatpush1.xpose.msra.mxu0 0.0
    %413 = vmatprep.subr.mxu0 0.0
    %414 = vmatpush1.xpose.msra.mxu0 0.0
    %415 = vmatprep.subr.mxu0 0.0
    %416 = vmatpush1.xpose.msra.mxu0 0.0
    %417 = vmatprep.subr.mxu0 0.0
    %418 = vmatpush1.xpose.msra.mxu0 0.0
    %419 = vmatprep.subr.mxu0 0.0
    %420 = vmatpush1.xpose.msra.mxu0 0.0
    %421 = vmatprep.subr.mxu0 0.0
    %422 = vmatpush1.xpose.msra.mxu0 0.0
    %423 = vmatprep.subr.mxu0 0.0
    %424 = vmatpush1.xpose.msra.mxu0 0.0
    %425 = vmatprep.subr.mxu0 0.0
    %426 = vmatpush1.xpose.msra.mxu0 0.0
    %427 = vmatprep.subr.mxu0 0.0
    %428 = vmatpush1.xpose.msra.mxu0 0.0
    %429 = vmatprep.subr.mxu0 0.0
    %430 = vmatpush1.xpose.msra.mxu0 0.0
    %431 = vmatprep.subr.mxu0 0.0
    %432 = vmatpush1.xpose.msra.mxu0 %v399
    %433 = vmatprep.subr.mxu0 0.0
    %434 = vmatpush2.xpose.msra.mxu0 0.0
    %435 = vmatprep.subr.mxu0 0.0
    %436 = vmatpush2.xpose.msra.mxu0 0.0
    %437 = vmatprep.subr.mxu0 0.0
    %438 = vmatpush2.xpose.msra.mxu0 0.0
    %439 = vmatprep.subr.mxu0 0.0
    %440 = vmatpush2.xpose.msra.mxu0 0.0
    %441 = vmatprep.subr.mxu0 0.0
    %442 = vmatpush2.xpose.msra.mxu0 0.0
    %443 = vmatprep.subr.mxu0 0.0
    %444 = vmatpush2.xpose.msra.mxu0 0.0
    %445 = vmatprep.subr.mxu0 0.0
    %446 = vmatpush2.xpose.msra.mxu0 0.0
    %447 = vmatprep.subr.mxu0 0.0
    %448 = vmatpush2.xpose.msra.mxu0 0.0
    %449 = vmatprep.subr.mxu0 0.0
    %450 = vmatpush2.xpose.msra.mxu0 0.0
    %451 = vmatprep.subr.mxu0 0.0
    %452 = vmatpush2.xpose.msra.mxu0 0.0
    %453 = vmatprep.subr.mxu0 0.0
    %454 = vmatpush2.xpose.msra.mxu0 0.0
    %455 = vmatprep.subr.mxu0 0.0
    %456 = vmatpush2.xpose.msra.mxu0 0.0
    %457 = vmatprep.subr.mxu0 0.0
    %458 = vmatpush2.xpose.msra.mxu0 0.0
    %459 = vmatprep.subr.mxu0 0.0
    %460 = vmatpush2.xpose.msra.mxu0 0.0
    %461 = vmatprep.subr.mxu0 0.0
    %462 = vmatpush2.xpose.msra.mxu0 0.0
    %463 = vmatprep.subr.mxu0 0.0
    %464 = vmatpush2.xpose.msra.mxu0 0.0
    %465 = vmatprep.mubr.f32.mxu0 0.0
    %466 = vmatmul.mubr.f32.gmra.mxu0 %v396
    %v467 = vpop.f32.mrf.mxu0
    %v468 = vadd.f32 0.0, %v467
    %v469 = vpop.f32.mrf.mxu0
    %470 = vdwg.mxu0
    %v471 = vmul.f32 %v468, 0.17677669
    %v472 = vlaneseq
    %v473 = vshrl.u32 %v472, 7
    %v474 = vsub.s32 0, %v473
    %v475 = vrot.slane %v117, %v474
    %v476 = vadd.f32 %v471, %v475
    %vm477 = vcmask 64512
    %v478 = vsel %vm477, %v476, -inf
    %479 = vmax.xlane.f32.xlu0 %v478
    %v480 = vpop.xlane.xlu0 %479
    %v481 = vsub.f32 %v476, %v480
    %v482 = vmul.f32 %v481, 1.442695
    %v483 = vpow.pop %v482
    %v484 = vsel %vm477, %v483, 0.0
    %485 = vadd.xlane.f32.xlu0 %v484
    %v486 = vpop.xlane.xlu0 %485
    %v487 = vrcp.pop %v486
    %v488 = vmul.f32 %v483, %v487
    %v490 = vsel %vm477, %v488, 0
    %492 = vmatprep.subr.mxu0 0.0
    %493 = vmatpush1.msra.mxu0 0.0
    %494 = vmatprep.subr.mxu0 0.0
    %495 = vmatpush1.msra.mxu0 0.0
    %496 = vmatprep.subr.mxu0 0.0
    %497 = vmatpush1.msra.mxu0 0.0
    %498 = vmatprep.subr.mxu0 0.0
    %499 = vmatpush1.msra.mxu0 0.0
    %500 = vmatprep.subr.mxu0 0.0
    %501 = vmatpush1.msra.mxu0 0.0
    %502 = vmatprep.subr.mxu0 0.0
    %503 = vmatpush1.msra.mxu0 0.0
    %504 = vmatprep.subr.mxu0 0.0
    %505 = vmatpush1.msra.mxu0 0.0
    %506 = vmatprep.subr.mxu0 0.0
    %507 = vmatpush1.msra.mxu0 0.0
    %508 = vmatprep.subr.mxu0 0.0
    %509 = vmatpush1.msra.mxu0 0.0
    %510 = vmatprep.subr.mxu0 0.0
    %511 = vmatpush1.msra.mxu0 0.0
    %512 = vmatprep.subr.mxu0 0.0
    %513 = vmatpush1.msra.mxu0 0.0
    %514 = vmatprep.subr.mxu0 0.0
    %515 = vmatpush1.msra.mxu0 0.0
    %516 = vmatprep.subr.mxu0 0.0
    %517 = vmatpush1.msra.mxu0 0.0
    %518 = vmatprep.subr.mxu0 0.0
    %519 = vmatpush1.msra.mxu0 0.0
    %520 = vmatprep.subr.mxu0 0.0
    %521 = vmatpush1.msra.mxu0 0.0
    %522 = vmatprep.subr.mxu0 0.0
    %523 = vmatpush1.msra.mxu0 %v394
    %524 = vmatprep.subr.mxu0 0.0
    %525 = vmatpush2.msra.mxu0 0.0
    %526 = vmatprep.subr.mxu0 0.0
    %527 = vmatpush2.msra.mxu0 0.0
    %528 = vmatprep.subr.mxu0 0.0
    %529 = vmatpush2.msra.mxu0 0.0
    %530 = vmatprep.subr.mxu0 0.0
    %531 = vmatpush2.msra.mxu0 0.0
    %532 = vmatprep.subr.mxu0 0.0
    %533 = vmatpush2.msra.mxu0 0.0
    %534 = vmatprep.subr.mxu0 0.0
    %535 = vmatpush2.msra.mxu0 0.0
    %536 = vmatprep.subr.mxu0 0.0
    %537 = vmatpush2.msra.mxu0 0.0
    %538 = vmatprep.subr.mxu0 0.0
    %539 = vmatpush2.msra.mxu0 0.0
    %540 = vmatprep.subr.mxu0 0.0
    %541 = vmatpush2.msra.mxu0 0.0
    %542 = vmatprep.subr.mxu0 0.0
    %543 = vmatpush2.msra.mxu0 0.0
    %544 = vmatprep.subr.mxu0 0.0
    %545 = vmatpush2.msra.mxu0 0.0
    %546 = vmatprep.subr.mxu0 0.0
    %547 = vmatpush2.msra.mxu0 0.0
    %548 = vmatprep.subr.mxu0 0.0
    %549 = vmatpush2.msra.mxu0 0.0
    %550 = vmatprep.subr.mxu0 0.0
    %551 = vmatpush2.msra.mxu0 0.0
    %552 = vmatprep.subr.mxu0 0.0
    %553 = vmatpush2.msra.mxu0 0.0
    %554 = vmatprep.subr.mxu0 0.0
    %555 = vmatpush2.msra.mxu0 0.0
    %556 = vmatprep.mubr.f32.mxu0 0.0
    %557 = vmatmul.mubr.f32.gmra.mxu0 %v490
    %v558 = vpop.f32.mrf.mxu0
    %v559 = vadd.f32 0.0, %v558
    %v560 = vpop.f32.mrf.mxu0
    %561 = vdwg.mxu0
    %v562 = vadd.f32 %v301, %v383
    %v563 = vadd.f32 %v303, %v388
    %v564 = vadd.f32 %v377, %v393
    %v566 = vsel %vm221, %v562, 0
    %v569 = vsel %vm221, %v563, 0
    %571 = vmatprep.subr.mxu0 0.0
    %572 = vmatpush1.xpose.msra.mxu0 0.0
    %573 = vmatprep.subr.mxu0 0.0
    %574 = vmatpush1.xpose.msra.mxu0 0.0
    %575 = vmatprep.subr.mxu0 0.0
    %576 = vmatpush1.xpose.msra.mxu0 0.0
    %577 = vmatprep.subr.mxu0 0.0
    %578 = vmatpush1.xpose.msra.mxu0 0.0
    %579 = vmatprep.subr.mxu0 0.0
    %580 = vmatpush1.xpose.msra.mxu0 0.0
    %581 = vmatprep.subr.mxu0 0.0
    %582 = vmatpush1.xpose.msra.mxu0 0.0
    %583 = vmatprep.subr.mxu0 0.0
    %584 = vmatpush1.xpose.msra.mxu0 0.0
    %585 = vmatprep.subr.mxu0 0.0
    %586 = vmatpush1.xpose.msra.mxu0 0.0
    %587 = vmatprep.subr.mxu0 0.0
    %588 = vmatpush1.xpose.msra.mxu0 0.0
    %589 = vmatprep.subr.mxu0 0.0
    %590 = vmatpush1.xpose.msra.mxu0 0.0
    %591 = vmatprep.subr.mxu0 0.0
    %592 = vmatpush1.xpose.msra.mxu0 0.0
    %593 = vmatprep.subr.mxu0 0.0
    %594 = vmatpush1.xpose.msra.mxu0 0.0
    %595 = vmatprep.subr.mxu0 0.0
    %596 = vmatpush1.xpose.msra.mxu0 0.0
    %597 = vmatprep.subr.mxu0 0.0
    %598 = vmatpush1.xpose.msra.mxu0 0.0
    %599 = vmatprep.subr.mxu0 0.0
    %600 = vmatpush1.xpose.msra.mxu0 0.0
    %601 = vmatprep.subr.mxu0 0.0
    %602 = vmatpush1.xpose.msra.mxu0 %v569
    %603 = vmatprep.subr.mxu0 0.0
    %604 = vmatpush2.xpose.msra.mxu0 0.0
    %605 = vmatprep.subr.mxu0 0.0
    %606 = vmatpush2.xpose.msra.mxu0 0.0
    %607 = vmatprep.subr.mxu0 0.0
    %608 = vmatpush2.xpose.msra.mxu0 0.0
    %609 = vmatprep.subr.mxu0 0.0
    %610 = vmatpush2.xpose.msra.mxu0 0.0
    %611 = vmatprep.subr.mxu0 0.0
    %612 = vmatpush2.xpose.msra.mxu0 0.0
    %613 = vmatprep.subr.mxu0 0.0
    %614 = vmatpush2.xpose.msra.mxu0 0.0
    %615 = vmatprep.subr.mxu0 0.0
    %616 = vmatpush2.xpose.msra.mxu0 0.0
    %617 = vmatprep.subr.mxu0 0.0
    %618 = vmatpush2.xpose.msra.mxu0 0.0
    %619 = vmatprep.subr.mxu0 0.0
    %620 = vmatpush2.xpose.msra.mxu0 0.0
    %621 = vmatprep.subr.mxu0 0.0
    %622 = vmatpush2.xpose.msra.mxu0 0.0
    %623 = vmatprep.subr.mxu0 0.0
    %624 = vmatpush2.xpose.msra.mxu0 0.0
    %625 = vmatprep.subr.mxu0 0.0
    %626 = vmatpush2.xpose.msra.mxu0 0.0
    %627 = vmatprep.subr.mxu0 0.0
    %628 = vmatpush2.xpose.msra.mxu0 0.0
    %629 = vmatprep.subr.mxu0 0.0
    %630 = vmatpush2.xpose.msra.mxu0 0.0
    %631 = vmatprep.subr.mxu0 0.0
    %632 = vmatpush2.xpose.msra.mxu0 0.0
    %633 = vmatprep.subr.mxu0 0.0
    %634 = vmatpush2.xpose.msra.mxu0 0.0
    %635 = vmatprep.mubr.f32.mxu0 0.0
    %636 = vmatmul.mubr.f32.gmra.mxu0 %v566
    %v637 = vpop.f32.mrf.mxu0
    %v638 = vadd.f32 0.0, %v637
    %v639 = vpop.f32.mrf.mxu0
    %640 = vdwg.mxu0
    %v641 = vmul.f32 %v638, 0.17677669
    %v642 = vlaneseq
    %v643 = vshrl.u32 %v642, 7
    %v644 = vsub.s32 1, %v643
    %v645 = vrot.slane %v117, %v644
    %v646 = vadd.f32 %v641, %v645
    %v647 = vsel %vm477, %v646, -inf
    %648 = vmax.xlane.f32.xlu0 %v647
    %v649 = vpop.xlane.xlu0 %648
    %v650 = vsub.f32 %v646, %v649
    %v651 = vmul.f32 %v650, 1.442695
    %v652 = vpow.pop %v651
    %v653 = vsel %vm477, %v652, 0.0
    %654 = vadd.xlane.f32.xlu0 %v653
    %v655 = vpop.xlane.xlu0 %654
    %v656 = vrcp.pop %v655
    %v657 = vmul.f32 %v652, %v656
    %v659 = vsel %vm477, %v657, 0
    %661 = vmatprep.subr.mxu0 0.0
    %662 = vmatpush1.msra.mxu0 0.0
    %663 = vmatprep.subr.mxu0 0.0
    %664 = vmatpush1.msra.mxu0 0.0
    %665 = vmatprep.subr.mxu0 0.0
    %666 = vmatpush1.msra.mxu0 0.0
    %667 = vmatprep.subr.mxu0 0.0
    %668 = vmatpush1.msra.mxu0 0.0
    %669 = vmatprep.subr.mxu0 0.0
    %670 = vmatpush1.msra.mxu0 0.0
    %671 = vmatprep.subr.mxu0 0.0
    %672 = vmatpush1.msra.mxu0 0.0
    %673 = vmatprep.subr.mxu0 0.0
    %674 = vmatpush1.msra.mxu0 0.0
    %675 = vmatprep.subr.mxu0 0.0
    %676 = vmatpush1.msra.mxu0 0.0
    %677 = vmatprep.subr.mxu0 0.0
    %678 = vmatpush1.msra.mxu0 0.0
    %679 = vmatprep.subr.mxu0 0.0
    %680 = vmatpush1.msra.mxu0 0.0
    %681 = vmatprep.subr.mxu0 0.0
    %682 = vmatpush1.msra.mxu0 0.0
    %683 = vmatprep.subr.mxu0 0.0
    %684 = vmatpush1.msra.mxu0 0.0
    %685 = vmatprep.subr.mxu0 0.0
    %686 = vmatpush1.msra.mxu0 0.0
    %687 = vmatprep.subr.mxu0 0.0
    %688 = vmatpush1.msra.mxu0 0.0
    %689 = vmatprep.subr.mxu0 0.0
    %690 = vmatpush1.msra.mxu0 0.0
    %691 = vmatprep.subr.mxu0 0.0
    %692 = vmatpush1.msra.mxu0 %v564
    %693 = vmatprep.subr.mxu0 0.0
    %694 = vmatpush2.msra.mxu0 0.0
    %695 = vmatprep.subr.mxu0 0.0
    %696 = vmatpush2.msra.mxu0 0.0
    %697 = vmatprep.subr.mxu0 0.0
    %698 = vmatpush2.msra.mxu0 0.0
    %699 = vmatprep.subr.mxu0 0.0
    %700 = vmatpush2.msra.mxu0 0.0
    %701 = vmatprep.subr.mxu0 0.0
    %702 = vmatpush2.msra.mxu0 0.0
    %703 = vmatprep.subr.mxu0 0.0
    %704 = vmatpush2.msra.mxu0 0.0
    %705 = vmatprep.subr.mxu0 0.0
    %706 = vmatpush2.msra.mxu0 0.0
    %707 = vmatprep.subr.mxu0 0.0
    %708 = vmatpush2.msra.mxu0 0.0
    %709 = vmatprep.subr.mxu0 0.0
    %710 = vmatpush2.msra.mxu0 0.0
    %711 = vmatprep.subr.mxu0 0.0
    %712 = vmatpush2.msra.mxu0 0.0
    %713 = vmatprep.subr.mxu0 0.0
    %714 = vmatpush2.msra.mxu0 0.0
    %715 = vmatprep.subr.mxu0 0.0
    %716 = vmatpush2.msra.mxu0 0.0
    %717 = vmatprep.subr.mxu0 0.0
    %718 = vmatpush2.msra.mxu0 0.0
    %719 = vmatprep.subr.mxu0 0.0
    %720 = vmatpush2.msra.mxu0 0.0
    %721 = vmatprep.subr.mxu0 0.0
    %722 = vmatpush2.msra.mxu0 0.0
    %723 = vmatprep.subr.mxu0 0.0
    %724 = vmatpush2.msra.mxu0 0.0
    %725 = vmatprep.mubr.f32.mxu0 0.0
    %726 = vmatmul.mubr.f32.gmra.mxu0 %v659
    %v727 = vpop.f32.mrf.mxu0
    %v728 = vadd.f32 0.0, %v727
    %v729 = vpop.f32.mrf.mxu0
    %730 = vdwg.mxu0
    %v731 = vlaneseq
    %v732 = vshrl.u32 %v731, 7
    %v733 = vsub.s32 3, %v732
    %v734 = vrot.slane %v111, %v733
    %v736 = vsel %vm221, %v559, 0
    %v739 = vsel %vm221, %v728, 0
    %741 = vmatprep.subr.mxu0 0.0
    %742 = vmatpush1.msra.mxu0 0.0
    %743 = vmatprep.subr.mxu0 0.0
    %744 = vmatpush1.msra.mxu0 0.0
    %745 = vmatprep.subr.mxu0 0.0
    %746 = vmatpush1.msra.mxu0 0.0
    %747 = vmatprep.subr.mxu0 0.0
    %748 = vmatpush1.msra.mxu0 0.0
    %749 = vmatprep.subr.mxu0 0.0
    %750 = vmatpush1.msra.mxu0 0.0
    %751 = vmatprep.subr.mxu0 0.0
    %752 = vmatpush1.msra.mxu0 0.0
    %753 = vmatprep.subr.mxu0 0.0
    %754 = vmatpush1.msra.mxu0 0.0
    %755 = vmatprep.subr.mxu0 0.0
    %756 = vmatpush1.msra.mxu0 0.0
    %757 = vmatprep.subr.mxu0 0.0
    %758 = vmatpush1.msra.mxu0 0.0
    %759 = vmatprep.subr.mxu0 0.0
    %760 = vmatpush1.msra.mxu0 0.0
    %761 = vmatprep.subr.mxu0 0.0
    %762 = vmatpush1.msra.mxu0 0.0
    %763 = vmatprep.subr.mxu0 0.0
    %764 = vmatpush1.msra.mxu0 0.0
    %765 = vmatprep.subr.mxu0 0.0
    %766 = vmatpush1.msra.mxu0 %v90
    %767 = vmatprep.subr.mxu0 0.0
    %768 = vmatpush1.msra.mxu0 %v84
    %769 = vmatprep.subr.mxu0 0.0
    %770 = vmatpush1.msra.mxu0 %v78
    %771 = vmatprep.subr.mxu0 0.0
    %772 = vmatpush1.msra.mxu0 %v72
    %773 = vmatprep.subr.mxu0 0.0
    %774 = vmatpush2.msra.mxu0 0.0
    %775 = vmatprep.subr.mxu0 0.0
    %776 = vmatpush2.msra.mxu0 0.0
    %777 = vmatprep.subr.mxu0 0.0
    %778 = vmatpush2.msra.mxu0 0.0
    %779 = vmatprep.subr.mxu0 0.0
    %780 = vmatpush2.msra.mxu0 0.0
    %781 = vmatprep.subr.mxu0 0.0
    %782 = vmatpush2.msra.mxu0 0.0
    %783 = vmatprep.subr.mxu0 0.0
    %784 = vmatpush2.msra.mxu0 0.0
    %785 = vmatprep.subr.mxu0 0.0
    %786 = vmatpush2.msra.mxu0 0.0
    %787 = vmatprep.subr.mxu0 0.0
    %788 = vmatpush2.msra.mxu0 0.0
    %789 = vmatprep.subr.mxu0 0.0
    %790 = vmatpush2.msra.mxu0 0.0
    %791 = vmatprep.subr.mxu0 0.0
    %792 = vmatpush2.msra.mxu0 0.0
    %793 = vmatprep.subr.mxu0 0.0
    %794 = vmatpush2.msra.mxu0 0.0
    %795 = vmatprep.subr.mxu0 0.0
    %796 = vmatpush2.msra.mxu0 0.0
    %797 = vmatprep.subr.mxu0 0.0
    %798 = vmatpush2.msra.mxu0 0.0
    %799 = vmatprep.subr.mxu0 0.0
    %800 = vmatpush2.msra.mxu0 0.0
    %801 = vmatprep.subr.mxu0 0.0
    %802 = vmatpush2.msra.mxu0 0.0
    %803 = vmatprep.subr.mxu0 0.0
    %804 = vmatpush2.msra.mxu0 0.0
    %805 = vmatprep.mubr.f32.mxu0 0.0
    %806 = vmatmul.mubr.f32.gmra.mxu0 %v736
    %v807 = vpop.f32.mrf.mxu0
    %v808 = vadd.f32 %v734, %v807
    %v809 = vpop.f32.mrf.mxu0
    %810 = vmatprep.mubr.f32.mxu0 0.0
    %811 = vmatmul.mubr.f32.gmra.mxu0 %v739
    %v812 = vpop.f32.mrf.mxu0
    %v813 = vadd.f32 %v734, %v812
    %v814 = vpop.f32.mrf.mxu0
    %815 = vdwg.mxu0
    %v816 = vadd.f32 %v213, %v808
    %v817 = vadd.f32 %v218, %v813
    %v818 = vsel %vm221, %v816, 0.0
    %819 = vadd.xlane.f32.xlu0 %v818
    %v820 = vpop.xlane.xlu0 %819
    %v821 = vsel %vm221, %v817, 0.0
    %822 = vadd.xlane.f32.xlu0 %v821
    %v823 = vpop.xlane.xlu0 %822
    %v824 = vrcp.pop 32.0
    %v825 = vmul.f32 %v820, %v824
    %v826 = vmul.f32 %v823, %v824
    %v827 = vsub.f32 %v816, %v825
    %v828 = vsub.f32 %v817, %v826
    %v829 = vmul.f32 %v827, %v827
    %v830 = vmul.f32 %v828, %v828
    %v831 = vsel %vm221, %v829, 0.0
    %832 = vadd.xlane.f32.xlu0 %v831
    %v833 = vpop.xlane.xlu0 %832
    %v834 = vsel %vm221, %v830, 0.0
    %835 = vadd.xlane.f32.xlu0 %v834
    %v836 = vpop.xlane.xlu0 %835
    %v837 = vmul.f32 %v833, %v824
    %v838 = vmul.f32 %v836, %v824
    %v839 = vadd.f32 %v837, 1e-05
    %v840 = vadd.f32 %v838, 1e-05
    %v841 = vrsqrt.pop %v839
    %v842 = vrsqrt.pop %v840
    %v843 = vmul.f32 %v827, %v841
    %v844 = vmul.f32 %v828, %v842
    %v845 = vlaneseq
    %v846 = vshrl.u32 %v845, 7
    %v847 = vsub.s32 6, %v846
    %v848 = vrot.slane %v111, %v847
    %v849 = vmul.f32 %v843, %v848
    %v850 = vmul.f32 %v844, %v848
    %v851 = vlaneseq
    %v852 = vshrl.u32 %v851, 7
    %v853 = vsub.s32 7, %v852
    %v854 = vrot.slane %v111, %v853
    %v855 = vadd.f32 %v849, %v854
    %v856 = vadd.f32 %v850, %v854
    %v857 = vlaneseq
    %v858 = vshrl.u32 %v857, 7
    %v859 = vsub.s32 4, %v858
    %v860 = vrot.slane %v111, %v859
    %v862 = vsel %vm221, %v855, 0
    %v865 = vsel %vm221, %v856, 0
    %867 = vmatprep.subr.mxu0 0.0
    %868 = vmatpush1.msra.mxu0 0.0
    %869 = vmatprep.subr.mxu0 0.0
    %870 = vmatpush1.msra.mxu0 0.0
    %871 = vmatprep.subr.mxu0 0.0
    %872 = vmatpush1.msra.mxu0 0.0
    %873 = vmatprep.subr.mxu0 0.0
    %874 = vmatpush1.msra.mxu0 0.0
    %875 = vmatprep.subr.mxu0 0.0
    %876 = vmatpush1.msra.mxu0 0.0
    %877 = vmatprep.subr.mxu0 0.0
    %878 = vmatpush1.msra.mxu0 0.0
    %879 = vmatprep.subr.mxu0 0.0
    %880 = vmatpush1.msra.mxu0 0.0
    %881 = vmatprep.subr.mxu0 0.0
    %882 = vmatpush1.msra.mxu0 0.0
    %883 = vmatprep.subr.mxu0 0.0
    %884 = vmatpush1.msra.mxu0 0.0
    %885 = vmatprep.subr.mxu0 0.0
    %886 = vmatpush1.msra.mxu0 0.0
    %887 = vmatprep.subr.mxu0 0.0
    %888 = vmatpush1.msra.mxu0 0.0
    %889 = vmatprep.subr.mxu0 0.0
    %890 = vmatpush1.msra.mxu0 0.0
    %891 = vmatprep.subr.mxu0 0.0
    %892 = vmatpush1.msra.mxu0 %v91
    %893 = vmatprep.subr.mxu0 0.0
    %894 = vmatpush1.msra.mxu0 %v85
    %895 = vmatprep.subr.mxu0 0.0
    %896 = vmatpush1.msra.mxu0 %v79
    %897 = vmatprep.subr.mxu0 0.0
    %898 = vmatpush1.msra.mxu0 %v73
    %899 = vmatprep.subr.mxu0 0.0
    %900 = vmatpush2.msra.mxu0 0.0
    %901 = vmatprep.subr.mxu0 0.0
    %902 = vmatpush2.msra.mxu0 0.0
    %903 = vmatprep.subr.mxu0 0.0
    %904 = vmatpush2.msra.mxu0 0.0
    %905 = vmatprep.subr.mxu0 0.0
    %906 = vmatpush2.msra.mxu0 0.0
    %907 = vmatprep.subr.mxu0 0.0
    %908 = vmatpush2.msra.mxu0 0.0
    %909 = vmatprep.subr.mxu0 0.0
    %910 = vmatpush2.msra.mxu0 0.0
    %911 = vmatprep.subr.mxu0 0.0
    %912 = vmatpush2.msra.mxu0 0.0
    %913 = vmatprep.subr.mxu0 0.0
    %914 = vmatpush2.msra.mxu0 0.0
    %915 = vmatprep.subr.mxu0 0.0
    %916 = vmatpush2.msra.mxu0 0.0
    %917 = vmatprep.subr.mxu0 0.0
    %918 = vmatpush2.msra.mxu0 0.0
    %919 = vmatprep.subr.mxu0 0.0
    %920 = vmatpush2.msra.mxu0 0.0
    %921 = vmatprep.subr.mxu0 0.0
    %922 = vmatpush2.msra.mxu0 0.0
    %923 = vmatprep.subr.mxu0 0.0
    %924 = vmatpush2.msra.mxu0 0.0
    %925 = vmatprep.subr.mxu0 0.0
    %926 = vmatpush2.msra.mxu0 0.0
    %927 = vmatprep.subr.mxu0 0.0
    %928 = vmatpush2.msra.mxu0 0.0
    %929 = vmatprep.subr.mxu0 0.0
    %930 = vmatpush2.msra.mxu0 0.0
    %931 = vmatprep.mubr.f32.mxu0 0.0
    %932 = vmatmul.mubr.f32.gmra.mxu0 %v862
    %v933 = vpop.f32.mrf.mxu0
    %v934 = vadd.f32 %v860, %v933
    %v935 = vpop.f32.mrf.mxu0
    %936 = vmatprep.mubr.f32.mxu0 0.0
    %937 = vmatmul.mubr.f32.gmra.mxu0 %v865
    %v938 = vpop.f32.mrf.mxu0
    %v939 = vadd.f32 %v860, %v938
    %v940 = vpop.f32.mrf.mxu0
    %941 = vdwg.mxu0
    %v942 = vmul.f32 %v934, %v934
    %v943 = vmul.f32 %v939, %v939
    %v944 = vmul.f32 %v934, %v942
    %v945 = vmul.f32 %v939, %v943
    %v946 = vmul.f32 %v944, 0.044715
    %v947 = vmul.f32 %v945, 0.044715
    %v948 = vadd.f32 %v934, %v946
    %v949 = vadd.f32 %v939, %v947
    %v950 = vmul.f32 %v948, 0.7978846
    %v951 = vmul.f32 %v949, 0.7978846
    %v952 = vtanh.pop %v950
    %v953 = vtanh.pop %v951
    %v954 = vadd.f32 %v952, 1.0
    %v955 = vadd.f32 %v953, 1.0
    %v956 = vmul.f32 %v954, 0.5
    %v957 = vmul.f32 %v955, 0.5
    %v958 = vmul.f32 %v934, %v956
    %v959 = vmul.f32 %v939, %v957
    %v960 = vlaneseq
    %v961 = vshrl.u32 %v960, 7
    %v962 = vsub.s32 5, %v961
    %v963 = vrot.slane %v111, %v962
    %v965 = vsel %vm139, %v958, 0
    %v968 = vsel %vm139, %v959, 0
    %970 = vmatprep.subr.mxu0 0.0
    %971 = vmatpush1.msra.mxu0 0.0
    %972 = vmatprep.subr.mxu0 0.0
    %973 = vmatpush1.msra.mxu0 0.0
    %974 = vmatprep.subr.mxu0 0.0
    %975 = vmatpush1.msra.mxu0 0.0
    %976 = vmatprep.subr.mxu0 0.0
    %977 = vmatpush1.msra.mxu0 0.0
    %978 = vmatprep.subr.mxu0 0.0
    %979 = vmatpush1.msra.mxu0 0.0
    %980 = vmatprep.subr.mxu0 0.0
    %981 = vmatpush1.msra.mxu0 0.0
    %982 = vmatprep.subr.mxu0 0.0
    %983 = vmatpush1.msra.mxu0 0.0
    %984 = vmatprep.subr.mxu0 0.0
    %985 = vmatpush1.msra.mxu0 0.0
    %986 = vmatprep.subr.mxu0 0.0
    %987 = vmatpush1.msra.mxu0 %v108
    %988 = vmatprep.subr.mxu0 0.0
    %989 = vmatpush1.msra.mxu0 %v106
    %990 = vmatprep.subr.mxu0 0.0
    %991 = vmatpush1.msra.mxu0 %v104
    %992 = vmatprep.subr.mxu0 0.0
    %993 = vmatpush1.msra.mxu0 %v102
    %994 = vmatprep.subr.mxu0 0.0
    %995 = vmatpush1.msra.mxu0 %v100
    %996 = vmatprep.subr.mxu0 0.0
    %997 = vmatpush1.msra.mxu0 %v98
    %998 = vmatprep.subr.mxu0 0.0
    %999 = vmatpush1.msra.mxu0 %v96
    %1000 = vmatprep.subr.mxu0 0.0
    %1001 = vmatpush1.msra.mxu0 %v94
    %1002 = vmatprep.subr.mxu0 0.0
    %1003 = vmatpush2.msra.mxu0 0.0
    %1004 = vmatprep.subr.mxu0 0.0
    %1005 = vmatpush2.msra.mxu0 0.0
    %1006 = vmatprep.subr.mxu0 0.0
    %1007 = vmatpush2.msra.mxu0 0.0
    %1008 = vmatprep.subr.mxu0 0.0
    %1009 = vmatpush2.msra.mxu0 0.0
    %1010 = vmatprep.subr.mxu0 0.0
    %1011 = vmatpush2.msra.mxu0 0.0
    %1012 = vmatprep.subr.mxu0 0.0
    %1013 = vmatpush2.msra.mxu0 0.0
    %1014 = vmatprep.subr.mxu0 0.0
    %1015 = vmatpush2.msra.mxu0 0.0
    %1016 = vmatprep.subr.mxu0 0.0
    %1017 = vmatpush2.msra.mxu0 0.0
    %1018 = vmatprep.subr.mxu0 0.0
    %1019 = vmatpush2.msra.mxu0 0.0
    %1020 = vmatprep.subr.mxu0 0.0
    %1021 = vmatpush2.msra.mxu0 0.0
    %1022 = vmatprep.subr.mxu0 0.0
    %1023 = vmatpush2.msra.mxu0 0.0
    %1024 = vmatprep.subr.mxu0 0.0
    %1025 = vmatpush2.msra.mxu0 0.0
    %1026 = vmatprep.subr.mxu0 0.0
    %1027 = vmatpush2.msra.mxu0 0.0
    %1028 = vmatprep.subr.mxu0 0.0
    %1029 = vmatpush2.msra.mxu0 0.0
    %1030 = vmatprep.subr.mxu0 0.0
    %1031 = vmatpush2.msra.mxu0 0.0
    %1032 = vmatprep.subr.mxu0 0.0
    %1033 = vmatpush2.msra.mxu0 0.0
    %1034 = vmatprep.mubr.f32.mxu0 0.0
    %1035 = vmatmul.mubr.f32.gmra.mxu0 %v965
    %v1036 = vpop.f32.mrf.mxu0
    %v1037 = vadd.f32 %v963, %v1036
    %v1038 = vpop.f32.mrf.mxu0
    %1039 = vmatprep.mubr.f32.mxu0 0.0
    %1040 = vmatmul.mubr.f32.gmra.mxu0 %v968
    %v1041 = vpop.f32.mrf.mxu0
    %v1042 = vadd.f32 %v963, %v1041
    %v1043 = vpop.f32.mrf.mxu0
    %1044 = vdwg.mxu0
    %v1045 = vadd.f32 %v855, %v1037
    %v1046 = vadd.f32 %v856, %v1042
    %v1047 = vsel %vm221, %v1045, 0.0
    %1048 = vadd.xlane.f32.xlu0 %v1047
    %v1049 = vpop.xlane.xlu0 %1048
    %v1050 = vsel %vm221, %v1046, 0.0
    %1051 = vadd.xlane.f32.xlu0 %v1050
    %v1052 = vpop.xlane.xlu0 %1051
    %v1053 = vmul.f32 %v1049, %v824
    %v1054 = vmul.f32 %v1052, %v824
    %v1055 = vsub.f32 %v1045, %v1053
    %v1056 = vsub.f32 %v1046, %v1054
    %v1057 = vmul.f32 %v1055, %v1055
    %v1058 = vmul.f32 %v1056, %v1056
    %v1059 = vsel %vm221, %v1057, 0.0
    %1060 = vadd.xlane.f32.xlu0 %v1059
    %v1061 = vpop.xlane.xlu0 %1060
    %v1062 = vsel %vm221, %v1058, 0.0
    %1063 = vadd.xlane.f32.xlu0 %v1062
    %v1064 = vpop.xlane.xlu0 %1063
    %v1065 = vmul.f32 %v1061, %v824
    %v1066 = vmul.f32 %v1064, %v824
    %v1067 = vadd.f32 %v1065, 1e-05
    %v1068 = vadd.f32 %v1066, 1e-05
    %v1069 = vrsqrt.pop %v1067
    %v1070 = vrsqrt.pop %v1068
    %v1071 = vmul.f32 %v1055, %v1069
    %v1072 = vmul.f32 %v1056, %v1070
    %v1073 = vlaneseq
    %v1074 = vshrl.u32 %v1073, 7
    %v1075 = vsub.s32 0, %v1074
    %v1076 = vrot.slane %v112, %v1075
    %v1077 = vmul.f32 %v1071, %v1076
    %v1078 = vmul.f32 %v1072, %v1076
    %v1079 = vlaneseq
    %v1080 = vshrl.u32 %v1079, 7
    %v1081 = vsub.s32 1, %v1080
    %v1082 = vrot.slane %v112, %v1081
    %v1083 = vadd.f32 %v1077, %v1082
    %v1084 = vadd.f32 %v1078, %v1082
    %v1085 = vcvt.s32.f32 %v126
    %v1086 = vlaneseq
    %v1087 = vshrl.u32 %v1086, 7
    %v1088 = vcvt.s32.f32 %v1087
    %v1089 = vmul.f32 %v1088, 8.0
    %v1090 = vadd.f32 %v1089, %v124
    %vm1091 = vcmp.eq.f32.partialorder %v1085, %v1090
    %v1092 = vsel %vm1091, 1, 0
    %v1093 = vcvt.s32.f32 %v1092
    %vm1094 = vcmask 130048
    %v1096 = vsel %vm1094, %v1093, 0
    %1098 = vmatprep.subr.mxu0 0.0
    %1099 = vmatpush1.msra.mxu0 0.0
    %1100 = vmatprep.subr.mxu0 0.0
    %1101 = vmatpush1.msra.mxu0 0.0
    %1102 = vmatprep.subr.mxu0 0.0
    %1103 = vmatpush1.msra.mxu0 0.0
    %1104 = vmatprep.subr.mxu0 0.0
    %1105 = vmatpush1.msra.mxu0 0.0
    %1106 = vmatprep.subr.mxu0 0.0
    %1107 = vmatpush1.msra.mxu0 0.0
    %1108 = vmatprep.subr.mxu0 0.0
    %1109 = vmatpush1.msra.mxu0 0.0
    %1110 = vmatprep.subr.mxu0 0.0
    %1111 = vmatpush1.msra.mxu0 0.0
    %1112 = vmatprep.subr.mxu0 0.0
    %1113 = vmatpush1.msra.mxu0 0.0
    %1114 = vmatprep.subr.mxu0 0.0
    %1115 = vmatpush1.msra.mxu0 0.0
    %1116 = vmatprep.subr.mxu0 0.0
    %1117 = vmatpush1.msra.mxu0 0.0
    %1118 = vmatprep.subr.mxu0 0.0
    %1119 = vmatpush1.msra.mxu0 0.0
    %1120 = vmatprep.subr.mxu0 0.0
    %1121 = vmatpush1.msra.mxu0 0.0
    %1122 = vmatprep.subr.mxu0 0.0
    %1123 = vmatpush1.msra.mxu0 0.0
    %1124 = vmatprep.subr.mxu0 0.0
    %1125 = vmatpush1.msra.mxu0 0.0
    %1126 = vmatprep.subr.mxu0 0.0
    %1127 = vmatpush1.msra.mxu0 %v1084
    %1128 = vmatprep.subr.mxu0 0.0
    %1129 = vmatpush1.msra.mxu0 %v1083
    %1130 = vmatprep.subr.mxu0 0.0
    %1131 = vmatpush2.msra.mxu0 0.0
    %1132 = vmatprep.subr.mxu0 0.0
    %1133 = vmatpush2.msra.mxu0 0.0
    %1134 = vmatprep.subr.mxu0 0.0
    %1135 = vmatpush2.msra.mxu0 0.0
    %1136 = vmatprep.subr.mxu0 0.0
    %1137 = vmatpush2.msra.mxu0 0.0
    %1138 = vmatprep.subr.mxu0 0.0
    %1139 = vmatpush2.msra.mxu0 0.0
    %1140 = vmatprep.subr.mxu0 0.0
    %1141 = vmatpush2.msra.mxu0 0.0
    %1142 = vmatprep.subr.mxu0 0.0
    %1143 = vmatpush2.msra.mxu0 0.0
    %1144 = vmatprep.subr.mxu0 0.0
    %1145 = vmatpush2.msra.mxu0 0.0
    %1146 = vmatprep.subr.mxu0 0.0
    %1147 = vmatpush2.msra.mxu0 0.0
    %1148 = vmatprep.subr.mxu0 0.0
    %1149 = vmatpush2.msra.mxu0 0.0
    %1150 = vmatprep.subr.mxu0 0.0
    %1151 = vmatpush2.msra.mxu0 0.0
    %1152 = vmatprep.subr.mxu0 0.0
    %1153 = vmatpush2.msra.mxu0 0.0
    %1154 = vmatprep.subr.mxu0 0.0
    %1155 = vmatpush2.msra.mxu0 0.0
    %1156 = vmatprep.subr.mxu0 0.0
    %1157 = vmatpush2.msra.mxu0 0.0
    %1158 = vmatprep.subr.mxu0 0.0
    %1159 = vmatpush2.msra.mxu0 0.0
    %1160 = vmatprep.subr.mxu0 0.0
    %1161 = vmatpush2.msra.mxu0 0.0
    %1162 = vmatprep.mubr.f32.mxu0 0.0
    %1163 = vmatmul.mubr.f32.gmra.mxu0 %v1096
    %v1164 = vpop.f32.mrf.mxu0
    %v1165 = vadd.f32 0.0, %v1164
    %v1166 = vpop.f32.mrf.mxu0
    %1167 = vdwg.mxu0
    %v1168 = vlaneseq
    %v1169 = vshrl.u32 %v1168, 7
    %v1170 = vsub.s32 2, %v1169
    %v1171 = vrot.slane %v112, %v1170
    %v1173 = vsel %vm221, %v1165, 0
    %1175 = vmatprep.subr.mxu0 0.0
    %1176 = vmatpush1.msra.mxu0 0.0
    %1177 = vmatprep.subr.mxu0 0.0
    %1178 = vmatpush1.msra.mxu0 0.0
    %1179 = vmatprep.subr.mxu0 0.0
    %1180 = vmatpush1.msra.mxu0 0.0
    %1181 = vmatprep.subr.mxu0 0.0
    %1182 = vmatpush1.msra.mxu0 0.0
    %1183 = vmatprep.subr.mxu0 0.0
    %1184 = vmatpush1.msra.mxu0 0.0
    %1185 = vmatprep.subr.mxu0 0.0
    %1186 = vmatpush1.msra.mxu0 0.0
    %1187 = vmatprep.subr.mxu0 0.0
    %1188 = vmatpush1.msra.mxu0 0.0
    %1189 = vmatprep.subr.mxu0 0.0
    %1190 = vmatpush1.msra.mxu0 0.0
    %1191 = vmatprep.subr.mxu0 0.0
    %1192 = vmatpush1.msra.mxu0 0.0
    %1193 = vmatprep.subr.mxu0 0.0
    %1194 = vmatpush1.msra.mxu0 0.0
    %1195 = vmatprep.subr.mxu0 0.0
    %1196 = vmatpush1.msra.mxu0 0.0
    %1197 = vmatprep.subr.mxu0 0.0
    %1198 = vmatpush1.msra.mxu0 0.0
    %1199 = vmatprep.subr.mxu0 0.0
    %1200 = vmatpush1.msra.mxu0 %v92
    %1201 = vmatprep.subr.mxu0 0.0
    %1202 = vmatpush1.msra.mxu0 %v86
    %1203 = vmatprep.subr.mxu0 0.0
    %1204 = vmatpush1.msra.mxu0 %v80
    %1205 = vmatprep.subr.mxu0 0.0
    %1206 = vmatpush1.msra.mxu0 %v74
    %1207 = vmatprep.subr.mxu0 0.0
    %1208 = vmatpush2.msra.mxu0 0.0
    %1209 = vmatprep.subr.mxu0 0.0
    %1210 = vmatpush2.msra.mxu0 0.0
    %1211 = vmatprep.subr.mxu0 0.0
    %1212 = vmatpush2.msra.mxu0 0.0
    %1213 = vmatprep.subr.mxu0 0.0
    %1214 = vmatpush2.msra.mxu0 0.0
    %1215 = vmatprep.subr.mxu0 0.0
    %1216 = vmatpush2.msra.mxu0 0.0
    %1217 = vmatprep.subr.mxu0 0.0
    %1218 = vmatpush2.msra.mxu0 0.0
    %1219 = vmatprep.subr.mxu0 0.0
    %1220 = vmatpush2.msra.mxu0 0.0
    %1221 = vmatprep.subr.mxu0 0.0
    %1222 = vmatpush2.msra.mxu0 0.0
    %1223 = vmatprep.subr.mxu0 0.0
    %1224 = vmatpush2.msra.mxu0 0.0
    %1225 = vmatprep.subr.mxu0 0.0
    %1226 = vmatpush2.msra.mxu0 0.0
    %1227 = vmatprep.subr.mxu0 0.0
    %1228 = vmatpush2.msra.mxu0 0.0
    %1229 = vmatprep.subr.mxu0 0.0
    %1230 = vmatpush2.msra.mxu0 0.0
    %1231 = vmatprep.subr.mxu0 0.0
    %1232 = vmatpush2.msra.mxu0 0.0
    %1233 = vmatprep.subr.mxu0 0.0
    %1234 = vmatpush2.msra.mxu0 0.0
    %1235 = vmatprep.subr.mxu0 0.0
    %1236 = vmatpush2.msra.mxu0 0.0
    %1237 = vmatprep.subr.mxu0 0.0
    %1238 = vmatpush2.msra.mxu0 0.0
    %1239 = vmatprep.mubr.f32.mxu0 0.0
    %1240 = vmatmul.mubr.f32.gmra.mxu0 %v1173
    %v1241 = vpop.f32.mrf.mxu0
    %v1242 = vadd.f32 %v1171, %v1241
    %v1243 = vpop.f32.mrf.mxu0
    %1244 = vdwg.mxu0
    %v1245 = vsub.f32 0.0, %v1242
    %v1246 = vmul.f32 %v1245, 1.442695
    %v1247 = vpow.pop %v1246
    %v1248 = vadd.f32 %v1247, 1.0
    %v1249 = vrcp.pop %v1248
    %v1250 = vmul.f32 1.0, %v1249
    %v1251 = vadd.f32 %v1250, 1e-10
    %v1252 = vlog2.pop %v1251
    %v1253 = vmul.f32 %v1252, 0.6931472
    %v1254 = vmul.f32 %v1253, %v68
    %v1255 = vsub.f32 1.0, %v1250
    %v1256 = vadd.f32 %v1255, 1e-10
    %v1257 = vlog2.pop %v1256
    %v1258 = vmul.f32 %v1257, 0.6931472
    %v1259 = vsub.f32 1.0, %v68
    %v1260 = vmul.f32 %v1258, %v1259
    %v1261 = vadd.f32 %v1254, %v1260
    %vm1262 = vcmask 1024
    %v1263 = vsel %vm1262, %v1261, 0.0
    %v1264 = vrot.slane %v1263, 4
    %v1265 = vadd.f32 %v1263, %v1264
    %v1266 = vrot.slane %v1265, 2
    %v1267 = vadd.f32 %v1265, %v1266
    %v1268 = vrot.slane %v1267, 1
    %v1269 = vadd.f32 %v1267, %v1268
    %v1270 = vsub.f32 0.0, %v1269
    %v1271 = vmul.f32 %v1270, 0.5
    %1273 = vset.pattern.permute.xlu0 0
    %1274 = vperm.xlu0 %1273, %v1271
    %v1275 = vpop.permute.xlu0 %1274
    %vm1277 = vcmask 1041408
    %v1278 = vsel %vm1277, %v1250, %v1275
    %1279 = vst [vmem:[%s6] sm:$0xff] %v1278
    // Predicated region
    $region38: #{model_forward.1} parent=1 // pred_check
      _
    $region39: #{model_forward.1} parent=1 // pred_check_branch
      %1281 = sbr.rel (0) target = $region41
    $region40: #{model_forward.1} parent=1 // pred_region
      _
    $region41: #{model_forward.1} parent=1 // pred_fallthru
      _
    // Predicated region
    $region42: #{model_forward.1} parent=1 // pred_check
      _
    $region43: #{model_forward.1} parent=1 // pred_check_branch
      %1283 = sbr.rel (0) target = $region45
    $region44: #{model_forward.1} parent=1 // pred_region
      _
    $region45: #{model_forward.1} parent=1 // pred_fallthru
      _
    %1284 = vsyncpa [#allocation3], 1
    %1285 = vsyncpa [#allocation5], 1

</llo_original>
